<compile_context>
chip_gen: v7x
topology: tpu7x:2x2x1
jax: 0.10.0
libtpu: 0.0.40
codegen_flags: <defaults>
</compile_context>

<pallas_src>
import jax
import jax.numpy as jnp
from jax.experimental import pallas as pl
from jax.experimental.pallas import tpu as pltpu

FEATURE_NUM = 16   # config.feature_num (synthetic)
HIDDEN = 256
HIDDEN2 = 512
OUT_LANES = 128    # lane-dense output slab; wrapper reads column 0


# ---------------------------------------------------------------------------
# Fused kernel: fc1+relu, x@W_ih^T (batched over time), Elman recurrence, head.
# ---------------------------------------------------------------------------
def make_fused_kernel(seq_len, batch):
    S, B = seq_len, batch

    def kernel(x_ref, w1t_ref, b1_ref, wiht_ref, whht_ref, brnn_ref,
               w2t_ref, b2_ref, w3_ref, b3_ref, out_ref):
        # ---- Hoisted, non-recurrent matmuls (all timesteps at once) ----
        # fc1 + relu: (S*B, F) @ (F, H) + b1
        a = jnp.dot(x_ref[...], w1t_ref[...], preferred_element_type=jnp.float32)
        a = jnp.maximum(a + b1_ref[...], 0.0)
        # RNN input projection + combined bias, also batched over all timesteps:
        # u_t = relu(fc1(x_t)) @ W_ih^T + (b_ih + b_hh)
        u = (jnp.dot(a, wiht_ref[...], preferred_element_type=jnp.float32)
             + brnn_ref[...])                                        # (S*B, H)

        # ---- Serial Elman recurrence: only h @ W_hh^T on the critical path ----
        H = whht_ref.shape[0]
        h = jnp.zeros((B, H), jnp.float32)                           # h0 = zeros
        for t in range(S):    # S is small & static -> fully unrolled, h stays in vregs
            z = u[t * B:(t + 1) * B, :] + jnp.dot(
                h, whht_ref[...], preferred_element_type=jnp.float32)
            h = jnp.tanh(z)

        # ---- Head fused into the same kernel ----
        z2 = (jnp.dot(h, w2t_ref[...], preferred_element_type=jnp.float32)
              + b2_ref[...])
        z2 = jnp.maximum(z2, 0.0)                                    # (B, H2)
        # fc3 as VPU multiply + lane reduction (avoid (B,512)@(512,1) MXU call)
        y = jnp.sum(z2 * w3_ref[...], axis=-1, keepdims=True) + b3_ref[...]   # (B, 1)
        # Lane-dense output slab: broadcast across 128 lanes.
        out_ref[...] = jnp.broadcast_to(y, out_ref.shape)

    return kernel


def earthquake_rnn_forward(x, params):
    """x: (B, S, F) like the PyTorch module (batch_first). Returns (B,)."""
    w1, b1, wih, whh, bih, bhh, w2, b2, w3, b3 = params
    B, S, F = x.shape

    # (B, S, F) -> time-major flattened (S*B, F): lets the kernel batch the fc1
    # and x@W_ih^T matmuls over all timesteps; row t*B + b == (timestep t, batch b).
    x_tm = jnp.transpose(x, (1, 0, 2)).reshape(S * B, F).astype(jnp.float32)

    vmem = pl.BlockSpec(memory_space=pltpu.MemorySpace.VMEM)
    out = pl.pallas_call(
        make_fused_kernel(S, B),
        out_shape=jax.ShapeDtypeStruct((B, OUT_LANES), jnp.float32),
        in_specs=[vmem] * 10,
        out_specs=vmem,
    )(
        x_tm,
        w1.T, b1[None, :],                 # fc1: W^T, bias
        wih.T, whh.T, (bih + bhh)[None, :],  # RNN: W_ih^T, W_hh^T, combined bias
        w2.T, b2[None, :],                 # fc2: W^T, bias
        w3, b3[None, :],                   # fc3: weight row (1, H2), bias (1, 1)
    )
    return out[:, 0]                       # (B,)  == PyTorch .squeeze()


earthquake_rnn_forward_jit = jax.jit(earthquake_rnn_forward)


# ---------------------------------------------------------------------------
# Parameter init (PyTorch-style uniform fan-in) and pure-JAX reference.
# ---------------------------------------------------------------------------
def init_params(key, feature_num=FEATURE_NUM, hidden=HIDDEN, hidden2=HIDDEN2):
    ks = jax.random.split(key, 10)

    def unif(k, shape, fan_in):
        bound = 1.0 / jnp.sqrt(jnp.float32(fan_in))
        return jax.random.uniform(k, shape, jnp.float32, -bound, bound)

    w1 = unif(ks[0], (hidden, feature_num), feature_num)   # fc1.weight
    b1 = unif(ks[1], (hidden,), feature_num)                # fc1.bias
    wih = unif(ks[2], (hidden, hidden), hidden)             # rnn.weight_ih_l0
    whh = unif(ks[3], (hidden, hidden), hidden)             # rnn.weight_hh_l0
    bih = unif(ks[4], (hidden,), hidden)                    # rnn.bias_ih_l0
    bhh = unif(ks[5], (hidden,), hidden)                    # rnn.bias_hh_l0
    w2 = unif(ks[6], (hidden2, hidden), hidden)             # fc2.weight
    b2 = unif(ks[7], (hidden2,), hidden)                    # fc2.bias
    w3 = unif(ks[8], (1, hidden2), hidden2)                 # fc3.weight
    b3 = unif(ks[9], (1,), hidden2)                         # fc3.bias
    return (w1, b1, wih, whh, bih, bhh, w2, b2, w3, b3)


def reference_forward(x, params):
    """Pure-JAX reference mirroring the PyTorch module."""
    w1, b1, wih, whh, bih, bhh, w2, b2, w3, b3 = params
    B, S, _ = x.shape
    xr = jax.nn.relu(x @ w1.T + b1)                 # (B, S, H)
    h = jnp.zeros((B, HIDDEN), jnp.float32)
    for t in range(S):
        h = jnp.tanh(xr[:, t] @ wih.T + bih + h @ whh.T + bhh)
    z = jax.nn.relu(h @ w2.T + b2)
    out = z @ w3.T + b3
    return jnp.squeeze(out)                         # (B,)


if __name__ == "__main__":
    key = jax.random.PRNGKey(0)
    kx, kp = jax.random.split(key)

    batch, seq = 2, 8
    x = jax.random.normal(kx, (batch, seq, FEATURE_NUM), jnp.float32)
    params = init_params(kp)

    out = earthquake_rnn_forward_jit(x, params)
    out = jax.block_until_ready(out)

    ref = reference_forward(x, params)
    assert out.shape == ref.shape == (batch,), (out.shape, ref.shape)
    assert jnp.allclose(out, ref, atol=1e-4, rtol=1e-4), (out, ref)

    print("KERNEL_OK")
</pallas_src>

<mosaic_0001>
module attributes {stable_mosaic.version = 11 : i64} {
  func.func @kernel(%arg0: memref<16x16xf32, #tpu.memory_space<vmem>>, %arg1: memref<16x256xf32, #tpu.memory_space<vmem>>, %arg2: memref<1x256xf32, #tpu.memory_space<vmem>>, %arg3: memref<256x256xf32, #tpu.memory_space<vmem>>, %arg4: memref<256x256xf32, #tpu.memory_space<vmem>>, %arg5: memref<1x256xf32, #tpu.memory_space<vmem>>, %arg6: memref<256x512xf32, #tpu.memory_space<vmem>>, %arg7: memref<1x512xf32, #tpu.memory_space<vmem>>, %arg8: memref<1x512xf32, #tpu.memory_space<vmem>>, %arg9: memref<1x1xf32, #tpu.memory_space<vmem>>, %arg10: memref<2x128xf32, #tpu.memory_space<vmem>>) attributes {dimension_semantics = [], scalar_prefetch = 0 : i64, scratch_operands = 0 : i64, tpu.core_type = #tpu.core_type<tc>} {
    %c0 = arith.constant 0 : index
    %c0_0 = arith.constant 0 : index
    %0 = vector.load %arg0[%c0, %c0_0] : memref<16x16xf32, #tpu.memory_space<vmem>>, vector<16x16xf32>
    %c0_1 = arith.constant 0 : index
    %c0_2 = arith.constant 0 : index
    %1 = vector.load %arg1[%c0_1, %c0_2] : memref<16x256xf32, #tpu.memory_space<vmem>>, vector<16x256xf32>
    %cst = arith.constant dense<0.000000e+00> : vector<16x256xf32>
    %2 = tpu.matmul %0, %1, %cst {dimension_numbers = #tpu.dot_dimension_numbers<[1], [0], [0], [1], [0, 0, 1, 1], [], []>} : vector<16x16xf32>, vector<16x256xf32>, vector<16x256xf32> -> vector<16x256xf32>
    %c0_3 = arith.constant 0 : index
    %c0_4 = arith.constant 0 : index
    %3 = vector.load %arg2[%c0_3, %c0_4] : memref<1x256xf32, #tpu.memory_space<vmem>>, vector<1x256xf32>
    %4 = vector.broadcast %3 : vector<1x256xf32> to vector<16x256xf32>
    %5 = arith.addf %2, %4 : vector<16x256xf32>
    %cst_5 = arith.constant 0.000000e+00 : f32
    %6 = vector.broadcast %cst_5 : f32 to vector<16x256xf32>
    %7 = arith.maximumf %5, %6 : vector<16x256xf32>
    %c0_6 = arith.constant 0 : index
    %c0_7 = arith.constant 0 : index
    %8 = vector.load %arg3[%c0_6, %c0_7] : memref<256x256xf32, #tpu.memory_space<vmem>>, vector<256x256xf32>
    %cst_8 = arith.constant dense<0.000000e+00> : vector<16x256xf32>
    %9 = tpu.matmul %7, %8, %cst_8 {dimension_numbers = #tpu.dot_dimension_numbers<[1], [0], [0], [1], [0, 0, 1, 1], [], []>} : vector<16x256xf32>, vector<256x256xf32>, vector<16x256xf32> -> vector<16x256xf32>
    %c0_9 = arith.constant 0 : index
    %c0_10 = arith.constant 0 : index
    %10 = vector.load %arg5[%c0_9, %c0_10] : memref<1x256xf32, #tpu.memory_space<vmem>>, vector<1x256xf32>
    %11 = vector.broadcast %10 : vector<1x256xf32> to vector<16x256xf32>
    %12 = arith.addf %9, %11 : vector<16x256xf32>
    %cst_11 = arith.constant 0.000000e+00 : f32
    %13 = vector.broadcast %cst_11 : f32 to vector<2x256xf32>
    %14 = vector.extract_strided_slice %12 {offsets = [0, 0], sizes = [2, 256], strides = [1, 1]} : vector<16x256xf32> to vector<2x256xf32>
    %c0_12 = arith.constant 0 : index
    %c0_13 = arith.constant 0 : index
    %15 = vector.load %arg4[%c0_12, %c0_13] : memref<256x256xf32, #tpu.memory_space<vmem>>, vector<256x256xf32>
    %cst_14 = arith.constant dense<0.000000e+00> : vector<2x256xf32>
    %16 = tpu.matmul %13, %15, %cst_14 {dimension_numbers = #tpu.dot_dimension_numbers<[1], [0], [0], [1], [0, 0, 1, 1], [], []>} : vector<2x256xf32>, vector<256x256xf32>, vector<2x256xf32> -> vector<2x256xf32>
    %17 = arith.addf %14, %16 : vector<2x256xf32>
    %18 = math.tanh %17 : vector<2x256xf32>
    %19 = vector.extract_strided_slice %12 {offsets = [2, 0], sizes = [2, 256], strides = [1, 1]} : vector<16x256xf32> to vector<2x256xf32>
    %c0_15 = arith.constant 0 : index
    %c0_16 = arith.constant 0 : index
    %20 = vector.load %arg4[%c0_15, %c0_16] : memref<256x256xf32, #tpu.memory_space<vmem>>, vector<256x256xf32>
    %cst_17 = arith.constant dense<0.000000e+00> : vector<2x256xf32>
    %21 = tpu.matmul %18, %20, %cst_17 {dimension_numbers = #tpu.dot_dimension_numbers<[1], [0], [0], [1], [0, 0, 1, 1], [], []>} : vector<2x256xf32>, vector<256x256xf32>, vector<2x256xf32> -> vector<2x256xf32>
    %22 = arith.addf %19, %21 : vector<2x256xf32>
    %23 = math.tanh %22 : vector<2x256xf32>
    %24 = vector.extract_strided_slice %12 {offsets = [4, 0], sizes = [2, 256], strides = [1, 1]} : vector<16x256xf32> to vector<2x256xf32>
    %c0_18 = arith.constant 0 : index
    %c0_19 = arith.constant 0 : index
    %25 = vector.load %arg4[%c0_18, %c0_19] : memref<256x256xf32, #tpu.memory_space<vmem>>, vector<256x256xf32>
    %cst_20 = arith.constant dense<0.000000e+00> : vector<2x256xf32>
    %26 = tpu.matmul %23, %25, %cst_20 {dimension_numbers = #tpu.dot_dimension_numbers<[1], [0], [0], [1], [0, 0, 1, 1], [], []>} : vector<2x256xf32>, vector<256x256xf32>, vector<2x256xf32> -> vector<2x256xf32>
    %27 = arith.addf %24, %26 : vector<2x256xf32>
    %28 = math.tanh %27 : vector<2x256xf32>
    %29 = vector.extract_strided_slice %12 {offsets = [6, 0], sizes = [2, 256], strides = [1, 1]} : vector<16x256xf32> to vector<2x256xf32>
    %c0_21 = arith.constant 0 : index
    %c0_22 = arith.constant 0 : index
    %30 = vector.load %arg4[%c0_21, %c0_22] : memref<256x256xf32, #tpu.memory_space<vmem>>, vector<256x256xf32>
    %cst_23 = arith.constant dense<0.000000e+00> : vector<2x256xf32>
    %31 = tpu.matmul %28, %30, %cst_23 {dimension_numbers = #tpu.dot_dimension_numbers<[1], [0], [0], [1], [0, 0, 1, 1], [], []>} : vector<2x256xf32>, vector<256x256xf32>, vector<2x256xf32> -> vector<2x256xf32>
    %32 = arith.addf %29, %31 : vector<2x256xf32>
    %33 = math.tanh %32 : vector<2x256xf32>
    %34 = vector.extract_strided_slice %12 {offsets = [8, 0], sizes = [2, 256], strides = [1, 1]} : vector<16x256xf32> to vector<2x256xf32>
    %c0_24 = arith.constant 0 : index
    %c0_25 = arith.constant 0 : index
    %35 = vector.load %arg4[%c0_24, %c0_25] : memref<256x256xf32, #tpu.memory_space<vmem>>, vector<256x256xf32>
    %cst_26 = arith.constant dense<0.000000e+00> : vector<2x256xf32>
    %36 = tpu.matmul %33, %35, %cst_26 {dimension_numbers = #tpu.dot_dimension_numbers<[1], [0], [0], [1], [0, 0, 1, 1], [], []>} : vector<2x256xf32>, vector<256x256xf32>, vector<2x256xf32> -> vector<2x256xf32>
    %37 = arith.addf %34, %36 : vector<2x256xf32>
    %38 = math.tanh %37 : vector<2x256xf32>
    %39 = vector.extract_strided_slice %12 {offsets = [10, 0], sizes = [2, 256], strides = [1, 1]} : vector<16x256xf32> to vector<2x256xf32>
    %c0_27 = arith.constant 0 : index
    %c0_28 = arith.constant 0 : index
    %40 = vector.load %arg4[%c0_27, %c0_28] : memref<256x256xf32, #tpu.memory_space<vmem>>, vector<256x256xf32>
    %cst_29 = arith.constant dense<0.000000e+00> : vector<2x256xf32>
    %41 = tpu.matmul %38, %40, %cst_29 {dimension_numbers = #tpu.dot_dimension_numbers<[1], [0], [0], [1], [0, 0, 1, 1], [], []>} : vector<2x256xf32>, vector<256x256xf32>, vector<2x256xf32> -> vector<2x256xf32>
    %42 = arith.addf %39, %41 : vector<2x256xf32>
    %43 = math.tanh %42 : vector<2x256xf32>
    %44 = vector.extract_strided_slice %12 {offsets = [12, 0], sizes = [2, 256], strides = [1, 1]} : vector<16x256xf32> to vector<2x256xf32>
    %c0_30 = arith.constant 0 : index
    %c0_31 = arith.constant 0 : index
    %45 = vector.load %arg4[%c0_30, %c0_31] : memref<256x256xf32, #tpu.memory_space<vmem>>, vector<256x256xf32>
    %cst_32 = arith.constant dense<0.000000e+00> : vector<2x256xf32>
    %46 = tpu.matmul %43, %45, %cst_32 {dimension_numbers = #tpu.dot_dimension_numbers<[1], [0], [0], [1], [0, 0, 1, 1], [], []>} : vector<2x256xf32>, vector<256x256xf32>, vector<2x256xf32> -> vector<2x256xf32>
    %47 = arith.addf %44, %46 : vector<2x256xf32>
    %48 = math.tanh %47 : vector<2x256xf32>
    %49 = vector.extract_strided_slice %12 {offsets = [14, 0], sizes = [2, 256], strides = [1, 1]} : vector<16x256xf32> to vector<2x256xf32>
    %c0_33 = arith.constant 0 : index
    %c0_34 = arith.constant 0 : index
    %50 = vector.load %arg4[%c0_33, %c0_34] : memref<256x256xf32, #tpu.memory_space<vmem>>, vector<256x256xf32>
    %cst_35 = arith.constant dense<0.000000e+00> : vector<2x256xf32>
    %51 = tpu.matmul %48, %50, %cst_35 {dimension_numbers = #tpu.dot_dimension_numbers<[1], [0], [0], [1], [0, 0, 1, 1], [], []>} : vector<2x256xf32>, vector<256x256xf32>, vector<2x256xf32> -> vector<2x256xf32>
    %52 = arith.addf %49, %51 : vector<2x256xf32>
    %53 = math.tanh %52 : vector<2x256xf32>
    %c0_36 = arith.constant 0 : index
    %c0_37 = arith.constant 0 : index
    %54 = vector.load %arg6[%c0_36, %c0_37] : memref<256x512xf32, #tpu.memory_space<vmem>>, vector<256x512xf32>
    %cst_38 = arith.constant dense<0.000000e+00> : vector<2x512xf32>
    %55 = tpu.matmul %53, %54, %cst_38 {dimension_numbers = #tpu.dot_dimension_numbers<[1], [0], [0], [1], [0, 0, 1, 1], [], []>} : vector<2x256xf32>, vector<256x512xf32>, vector<2x512xf32> -> vector<2x512xf32>
    %c0_39 = arith.constant 0 : index
    %c0_40 = arith.constant 0 : index
    %56 = vector.load %arg7[%c0_39, %c0_40] : memref<1x512xf32, #tpu.memory_space<vmem>>, vector<1x512xf32>
    %57 = vector.broadcast %56 : vector<1x512xf32> to vector<2x512xf32>
    %58 = arith.addf %55, %57 : vector<2x512xf32>
    %cst_41 = arith.constant 0.000000e+00 : f32
    %59 = vector.broadcast %cst_41 : f32 to vector<2x512xf32>
    %60 = arith.maximumf %58, %59 : vector<2x512xf32>
    %c0_42 = arith.constant 0 : index
    %c0_43 = arith.constant 0 : index
    %61 = vector.load %arg8[%c0_42, %c0_43] : memref<1x512xf32, #tpu.memory_space<vmem>>, vector<1x512xf32>
    %62 = vector.broadcast %61 : vector<1x512xf32> to vector<2x512xf32>
    %63 = arith.mulf %60, %62 : vector<2x512xf32>
    %cst_44 = arith.constant dense<0.000000e+00> : vector<2xf32>
    %64 = vector.multi_reduction <add>, %63, %cst_44 [1] : vector<2x512xf32> to vector<2xf32>
    %65 = vector.shape_cast %64 : vector<2xf32> to vector<2x1xf32>
    %c0_45 = arith.constant 0 : index
    %c0_46 = arith.constant 0 : index
    %66 = vector.load %arg9[%c0_45, %c0_46] : memref<1x1xf32, #tpu.memory_space<vmem>>, vector<1x1xf32>
    %67 = vector.broadcast %66 : vector<1x1xf32> to vector<2x1xf32>
    %68 = arith.addf %65, %67 : vector<2x1xf32>
    %69 = vector.shape_cast %68 : vector<2x1xf32> to vector<2x1xf32>
    %70 = vector.broadcast %69 : vector<2x1xf32> to vector<2x128xf32>
    %c0_47 = arith.constant 0 : index
    %c0_48 = arith.constant 0 : index
    %71 = vector.load %arg10[%c0_47, %c0_48] : memref<2x128xf32, #tpu.memory_space<vmem>>, vector<2x128xf32>
    tpu.vector_store %arg10[%c0_47, %c0_48], %70 {strides = array<i32>} : memref<2x128xf32, #tpu.memory_space<vmem>>, vector<2x128xf32>,
    return
  }
}

</mosaic_0001>

<llo_original>
// kernel: earthquake_rnn_forward.1
$region0: #{earthquake_rnn_forward.1}
  #allocation0 [shape = 'u32[]', space=smem, size = 0x4, offset = 0x4, fixed_abs, tag = 'smem constant byte address 0x4 - core index']
  #allocation1 [shape = 'u32[144,128]{1,0:T(1,128)}', space=vmem, size = 0x12000, scoped, tag = 'internal scratch']
  #allocation2 [shape = 'f32[1,1]{1,0:T(1,128)S(1)}', space=vmem, size = 0x200, scoped, tag = 'scoped memory for earthquake_rnn_forward.1']
  %s0 = inlined_call_operand.vmem [shape: f32[16,16], index: 0, kind: input, shape index: {}]
  %s1 = inlined_call_operand.vmem [shape: f32[16,256], index: 1, kind: input, shape index: {}]
  %s2 = inlined_call_operand.vmem [shape: f32[1,256], index: 2, kind: input, shape index: {}]
  %s3 = inlined_call_operand.vmem [shape: f32[256,256], index: 3, kind: input, shape index: {}]
  %s4 = inlined_call_operand.vmem [shape: f32[256,256], index: 4, kind: input, shape index: {}]
  %s5 = inlined_call_operand.vmem [shape: f32[1,256], index: 5, kind: input, shape index: {}]
  %s6 = inlined_call_operand.vmem [shape: f32[256,512], index: 6, kind: input, shape index: {}]
  %s7 = inlined_call_operand.vmem [shape: f32[1,512], index: 7, kind: input, shape index: {}]
  %s8 = inlined_call_operand.vmem [shape: f32[1,512], index: 8, kind: input, shape index: {}]
  %s9 = inlined_call_operand.<no memory space> [shape: f32[1,1], index: 9, kind: input, shape index: {}]
  %s10 = inlined_call_operand.vmem [shape: f32[2,128], index: 10, kind: output, shape index: {}]
  %s11 = sld [smem:[#allocation0]]
  $region50: #{earthquake_rnn_forward.1} parent=0
    _
  %s13 = ssub.s32 1, %s11
  %s14 = scalar_select 0, %s13, %s11
  %v15 = vstv %s9
  %16 = vst [vmem:[#allocation2] sm:$0x1] %v15
  // Predicated region
  $region2: #{earthquake_rnn_forward.1} parent=0 // pred_check
    _
  $region3: #{earthquake_rnn_forward.1} parent=0 // pred_check_branch
    %18 = sbr.rel (0) target = $region5
  $region4: #{earthquake_rnn_forward.1} parent=0 // pred_region
    _
  $region5: #{earthquake_rnn_forward.1} parent=0 // pred_fallthru
    _
  // Predicated region
  $region6: #{earthquake_rnn_forward.1} parent=0 // pred_check
    _
  $region7: #{earthquake_rnn_forward.1} parent=0 // pred_check_branch
    %20 = sbr.rel (0) target = $region9
  $region8: #{earthquake_rnn_forward.1} parent=0 // pred_region
    _
  $region9: #{earthquake_rnn_forward.1} parent=0 // pred_fallthru
    _
  // Predicated region
  $region10: #{earthquake_rnn_forward.1} parent=0 // pred_check
    _
  $region11: #{earthquake_rnn_forward.1} parent=0 // pred_check_branch
    %22 = sbr.rel (0) target = $region13
  $region12: #{earthquake_rnn_forward.1} parent=0 // pred_region
    _
  $region13: #{earthquake_rnn_forward.1} parent=0 // pred_fallthru
    _
  // Predicated region
  $region14: #{earthquake_rnn_forward.1} parent=0 // pred_check
    _
  $region15: #{earthquake_rnn_forward.1} parent=0 // pred_check_branch
    %24 = sbr.rel (0) target = $region17
  $region16: #{earthquake_rnn_forward.1} parent=0 // pred_region
    _
  $region17: #{earthquake_rnn_forward.1} parent=0 // pred_fallthru
    _
  // Predicated region
  $region18: #{earthquake_rnn_forward.1} parent=0 // pred_check
    _
  $region19: #{earthquake_rnn_forward.1} parent=0 // pred_check_branch
    %26 = sbr.rel (0) target = $region21
  $region20: #{earthquake_rnn_forward.1} parent=0 // pred_region
    _
  $region21: #{earthquake_rnn_forward.1} parent=0 // pred_fallthru
    _
  // Predicated region
  $region22: #{earthquake_rnn_forward.1} parent=0 // pred_check
    _
  $region23: #{earthquake_rnn_forward.1} parent=0 // pred_check_branch
    %28 = sbr.rel (0) target = $region25
  $region24: #{earthquake_rnn_forward.1} parent=0 // pred_region
    _
  $region25: #{earthquake_rnn_forward.1} parent=0 // pred_fallthru
    _
  // Predicated region
  $region26: #{earthquake_rnn_forward.1} parent=0 // pred_check
    _
  $region27: #{earthquake_rnn_forward.1} parent=0 // pred_check_branch
    %30 = sbr.rel (0) target = $region29
  $region28: #{earthquake_rnn_forward.1} parent=0 // pred_region
    _
  $region29: #{earthquake_rnn_forward.1} parent=0 // pred_fallthru
    _
  // Predicated region
  $region30: #{earthquake_rnn_forward.1} parent=0 // pred_check
    _
  $region31: #{earthquake_rnn_forward.1} parent=0 // pred_check_branch
    %32 = sbr.rel (0) target = $region33
  $region32: #{earthquake_rnn_forward.1} parent=0 // pred_region
    _
  $region33: #{earthquake_rnn_forward.1} parent=0 // pred_fallthru
    _
  // Predicated region
  $region34: #{earthquake_rnn_forward.1} parent=0 // pred_check
    _
  $region35: #{earthquake_rnn_forward.1} parent=0 // pred_check_branch
    %34 = sbr.rel (0) target = $region37
  $region36: #{earthquake_rnn_forward.1} parent=0 // pred_region
    _
  $region37: #{earthquake_rnn_forward.1} parent=0 // pred_fallthru
    _
  // Predicated region
  $region38: #{earthquake_rnn_forward.1} parent=0 // pred_check
    _
  $region39: #{earthquake_rnn_forward.1} parent=0 // pred_check_branch
    %36 = sbr.rel (0) target = $region41
  $region40: #{earthquake_rnn_forward.1} parent=0 // pred_region
    _
  $region41: #{earthquake_rnn_forward.1} parent=0 // pred_fallthru
    _
  %v37 = vld [vmem:[%s0] sm:$0xff]
  %v38 = vld [vmem:[%s0 + $0x8] sm:$0xff]
  %v39 = vld [vmem:[%s1] sm:$0xff]
  %v40 = vld [vmem:[%s1 + $0x8] sm:$0xff]
  %v41 = vld [vmem:[%s1 + $0x10] sm:$0xff]
  %v42 = vld [vmem:[%s1 + $0x18] sm:$0xff]
  %v43 = vld [vmem:[%s2] sm:$0x3]
  %v45 = vlaneseq
  %v46 = vshrl.u32 %v45, 7
  %v47 = vsub.s32 0, %v46
  %v48 = vrot.slane %v43, %v47
  %v49 = vlaneseq
  %v50 = vshrl.u32 %v49, 7
  %v51 = vsub.s32 1, %v50
  %v52 = vrot.slane %v43, %v51
  %vm55 = vcmask 130048
  %v57 = vsel %vm55, %v37, 0
  %v60 = vsel %vm55, %v38, 0
  %62 = vmatprep.subr.mxu0 %v40
  %63 = vmatpush1.msra.mxu0 %v39
  %64 = vmatprep.subr.mxu0 %v42
  %65 = vmatpush1.msra.mxu0 %v41
  %66 = vmatprep.subr.mxu0 0.0
  %67 = vmatpush1.msra.mxu0 0.0
  %68 = vmatprep.subr.mxu0 0.0
  %69 = vmatpush1.msra.mxu0 0.0
  %70 = vmatprep.subr.mxu0 0.0
  %71 = vmatpush1.msra.mxu0 0.0
  %72 = vmatprep.subr.mxu0 0.0
  %73 = vmatpush1.msra.mxu0 0.0
  %74 = vmatprep.subr.mxu0 0.0
  %75 = vmatpush1.msra.mxu0 0.0
  %76 = vmatprep.subr.mxu0 0.0
  %77 = vmatpush1.msra.mxu0 0.0
  %78 = vmatprep.subr.mxu0 0.0
  %79 = vmatpush1.msra.mxu0 0.0
  %80 = vmatprep.subr.mxu0 0.0
  %81 = vmatpush1.msra.mxu0 0.0
  %82 = vmatprep.subr.mxu0 0.0
  %83 = vmatpush1.msra.mxu0 0.0
  %84 = vmatprep.subr.mxu0 0.0
  %85 = vmatpush1.msra.mxu0 0.0
  %86 = vmatprep.subr.mxu0 0.0
  %87 = vmatpush1.msra.mxu0 0.0
  %88 = vmatprep.subr.mxu0 0.0
  %89 = vmatpush1.msra.mxu0 0.0
  %90 = vmatprep.subr.mxu0 0.0
  %91 = vmatpush1.msra.mxu0 0.0
  %92 = vmatprep.subr.mxu0 0.0
  %93 = vmatpush1.msra.mxu0 0.0
  %94 = vmatprep.subr.mxu0 0.0
  %95 = vmatpush1.msra.mxu0 0.0
  %96 = vmatprep.subr.mxu0 0.0
  %97 = vmatpush1.msra.mxu0 0.0
  %98 = vmatprep.subr.mxu0 0.0
  %99 = vmatpush1.msra.mxu0 0.0
  %100 = vmatprep.subr.mxu0 0.0
  %101 = vmatpush1.msra.mxu0 0.0
  %102 = vmatprep.subr.mxu0 0.0
  %103 = vmatpush1.msra.mxu0 0.0
  %104 = vmatprep.subr.mxu0 0.0
  %105 = vmatpush1.msra.mxu0 0.0
  %106 = vmatprep.subr.mxu0 0.0
  %107 = vmatpush1.msra.mxu0 0.0
  %108 = vmatprep.subr.mxu0 0.0
  %109 = vmatpush1.msra.mxu0 0.0
  %110 = vmatprep.subr.mxu0 0.0
  %111 = vmatpush1.msra.mxu0 0.0
  %112 = vmatprep.subr.mxu0 0.0
  %113 = vmatpush1.msra.mxu0 0.0
  %114 = vmatprep.subr.mxu0 0.0
  %115 = vmatpush1.msra.mxu0 0.0
  %116 = vmatprep.subr.mxu0 0.0
  %117 = vmatpush1.msra.mxu0 0.0
  %118 = vmatprep.subr.mxu0 0.0
  %119 = vmatpush1.msra.mxu0 0.0
  %120 = vmatprep.subr.mxu0 0.0
  %121 = vmatpush1.msra.mxu0 0.0
  %122 = vmatprep.subr.mxu0 0.0
  %123 = vmatpush1.msra.mxu0 0.0
  %124 = vmatprep.subr.mxu0 0.0
  %125 = vmatpush1.msra.mxu0 0.0
  %126 = vmatprep.mubr.f32.mxu0 0.0
  %127 = vmatmul.mubr.f32.gmra.mrb[0].mxu0 %v57
  %v128 = vpop.f32.mrb[0].mxu0
  %v129 = vadd.f32 %v48, %v128
  %v130 = vpop.f32.mrb[0].mxu0
  %v131 = vadd.f32 %v52, %v130
  %132 = vmatprep.mubr.f32.mxu0 0.0
  %133 = vmatmul.mubr.f32.gmra.mrb[0].mxu0 %v60
  %v134 = vpop.f32.mrb[0].mxu0
  %v135 = vadd.f32 %v48, %v134
  %v136 = vpop.f32.mrb[0].mxu0
  %v137 = vadd.f32 %v52, %v136
  %138 = vdwg.mxu0
  %v139 = vmax.f32 %v129, 0.0
  %v140 = vmax.f32 %v131, 0.0
  %v141 = vmax.f32 %v135, 0.0
  %v142 = vmax.f32 %v137, 0.0
  %v143 = vld [vmem:[%s3] sm:$0xff]
  %v144 = vld [vmem:[%s3 + $0x8] sm:$0xff]
  %v145 = vld [vmem:[%s3 + $0x10] sm:$0xff]
  %v146 = vld [vmem:[%s3 + $0x18] sm:$0xff]
  %v147 = vld [vmem:[%s3 + $0x20] sm:$0xff]
  %v148 = vld [vmem:[%s3 + $0x28] sm:$0xff]
  %v149 = vld [vmem:[%s3 + $0x30] sm:$0xff]
  %v150 = vld [vmem:[%s3 + $0x38] sm:$0xff]
  %v151 = vld [vmem:[%s3 + $0x40] sm:$0xff]
  %v152 = vld [vmem:[%s3 + $0x48] sm:$0xff]
  %v153 = vld [vmem:[%s3 + $0x50] sm:$0xff]
  %v154 = vld [vmem:[%s3 + $0x58] sm:$0xff]
  %v155 = vld [vmem:[%s3 + $0x60] sm:$0xff]
  %v156 = vld [vmem:[%s3 + $0x68] sm:$0xff]
  %v157 = vld [vmem:[%s3 + $0x70] sm:$0xff]
  %v158 = vld [vmem:[%s3 + $0x78] sm:$0xff]
  %v159 = vld [vmem:[%s3 + $0x80] sm:$0xff]
  %v160 = vld [vmem:[%s3 + $0x88] sm:$0xff]
  %v161 = vld [vmem:[%s3 + $0x90] sm:$0xff]
  %v162 = vld [vmem:[%s3 + $0x98] sm:$0xff]
  %v163 = vld [vmem:[%s3 + $0xa0] sm:$0xff]
  %v164 = vld [vmem:[%s3 + $0xa8] sm:$0xff]
  %v165 = vld [vmem:[%s3 + $0xb0] sm:$0xff]
  %v166 = vld [vmem:[%s3 + $0xb8] sm:$0xff]
  %v167 = vld [vmem:[%s3 + $0xc0] sm:$0xff]
  %v168 = vld [vmem:[%s3 + $0xc8] sm:$0xff]
  %v169 = vld [vmem:[%s3 + $0xd0] sm:$0xff]
  %v170 = vld [vmem:[%s3 + $0xd8] sm:$0xff]
  %v171 = vld [vmem:[%s3 + $0xe0] sm:$0xff]
  %v172 = vld [vmem:[%s3 + $0xe8] sm:$0xff]
  %v173 = vld [vmem:[%s3 + $0xf0] sm:$0xff]
  %v174 = vld [vmem:[%s3 + $0xf8] sm:$0xff]
  %v175 = vld [vmem:[%s3 + $0x100] sm:$0xff]
  %v176 = vld [vmem:[%s3 + $0x108] sm:$0xff]
  %v177 = vld [vmem:[%s3 + $0x110] sm:$0xff]
  %v178 = vld [vmem:[%s3 + $0x118] sm:$0xff]
  %v179 = vld [vmem:[%s3 + $0x120] sm:$0xff]
  %v180 = vld [vmem:[%s3 + $0x128] sm:$0xff]
  %v181 = vld [vmem:[%s3 + $0x130] sm:$0xff]
  %v182 = vld [vmem:[%s3 + $0x138] sm:$0xff]
  %v183 = vld [vmem:[%s3 + $0x140] sm:$0xff]
  %v184 = vld [vmem:[%s3 + $0x148] sm:$0xff]
  %v185 = vld [vmem:[%s3 + $0x150] sm:$0xff]
  %v186 = vld [vmem:[%s3 + $0x158] sm:$0xff]
  %v187 = vld [vmem:[%s3 + $0x160] sm:$0xff]
  %v188 = vld [vmem:[%s3 + $0x168] sm:$0xff]
  %v189 = vld [vmem:[%s3 + $0x170] sm:$0xff]
  %v190 = vld [vmem:[%s3 + $0x178] sm:$0xff]
  %v191 = vld [vmem:[%s3 + $0x180] sm:$0xff]
  %v192 = vld [vmem:[%s3 + $0x188] sm:$0xff]
  %v193 = vld [vmem:[%s3 + $0x190] sm:$0xff]
  %v194 = vld [vmem:[%s3 + $0x198] sm:$0xff]
  %v195 = vld [vmem:[%s3 + $0x1a0] sm:$0xff]
  %v196 = vld [vmem:[%s3 + $0x1a8] sm:$0xff]
  %v197 = vld [vmem:[%s3 + $0x1b0] sm:$0xff]
  %v198 = vld [vmem:[%s3 + $0x1b8] sm:$0xff]
  %v199 = vld [vmem:[%s3 + $0x1c0] sm:$0xff]
  %v200 = vld [vmem:[%s3 + $0x1c8] sm:$0xff]
  %v201 = vld [vmem:[%s3 + $0x1d0] sm:$0xff]
  %v202 = vld [vmem:[%s3 + $0x1d8] sm:$0xff]
  %v203 = vld [vmem:[%s3 + $0x1e0] sm:$0xff]
  %v204 = vld [vmem:[%s3 + $0x1e8] sm:$0xff]
  %v205 = vld [vmem:[%s3 + $0x1f0] sm:$0xff]
  %v206 = vld [vmem:[%s3 + $0x1f8] sm:$0xff]
  %v207 = vld [vmem:[%s5] sm:$0x3]
  %v209 = vlaneseq
  %v210 = vshrl.u32 %v209, 7
  %v211 = vsub.s32 0, %v210
  %v212 = vrot.slane %v207, %v211
  %v213 = vlaneseq
  %v214 = vshrl.u32 %v213, 7
  %v215 = vsub.s32 1, %v214
  %v216 = vrot.slane %v207, %v215
  %219 = vmatprep.subr.mxu0 %v144
  %220 = vmatpush1.msra.mxu0 %v143
  %221 = vmatprep.subr.mxu0 %v146
  %222 = vmatpush1.msra.mxu0 %v145
  %223 = vmatprep.subr.mxu0 %v148
  %224 = vmatpush1.msra.mxu0 %v147
  %225 = vmatprep.subr.mxu0 %v150
  %226 = vmatpush1.msra.mxu0 %v149
  %227 = vmatprep.subr.mxu0 %v152
  %228 = vmatpush1.msra.mxu0 %v151
  %229 = vmatprep.subr.mxu0 %v154
  %230 = vmatpush1.msra.mxu0 %v153
  %231 = vmatprep.subr.mxu0 %v156
  %232 = vmatpush1.msra.mxu0 %v155
  %233 = vmatprep.subr.mxu0 %v158
  %234 = vmatpush1.msra.mxu0 %v157
  %235 = vmatprep.subr.mxu0 %v160
  %236 = vmatpush1.msra.mxu0 %v159
  %237 = vmatprep.subr.mxu0 %v162
  %238 = vmatpush1.msra.mxu0 %v161
  %239 = vmatprep.subr.mxu0 %v164
  %240 = vmatpush1.msra.mxu0 %v163
  %241 = vmatprep.subr.mxu0 %v166
  %242 = vmatpush1.msra.mxu0 %v165
  %243 = vmatprep.subr.mxu0 %v168
  %244 = vmatpush1.msra.mxu0 %v167
  %245 = vmatprep.subr.mxu0 %v170
  %246 = vmatpush1.msra.mxu0 %v169
  %247 = vmatprep.subr.mxu0 %v172
  %248 = vmatpush1.msra.mxu0 %v171
  %249 = vmatprep.subr.mxu0 %v174
  %250 = vmatpush1.msra.mxu0 %v173
  %251 = vmatprep.subr.mxu0 %v176
  %252 = vmatpush1.msra.mxu0 %v175
  %253 = vmatprep.subr.mxu0 %v178
  %254 = vmatpush1.msra.mxu0 %v177
  %255 = vmatprep.subr.mxu0 %v180
  %256 = vmatpush1.msra.mxu0 %v179
  %257 = vmatprep.subr.mxu0 %v182
  %258 = vmatpush1.msra.mxu0 %v181
  %259 = vmatprep.subr.mxu0 %v184
  %260 = vmatpush1.msra.mxu0 %v183
  %261 = vmatprep.subr.mxu0 %v186
  %262 = vmatpush1.msra.mxu0 %v185
  %263 = vmatprep.subr.mxu0 %v188
  %264 = vmatpush1.msra.mxu0 %v187
  %265 = vmatprep.subr.mxu0 %v190
  %266 = vmatpush1.msra.mxu0 %v189
  %267 = vmatprep.subr.mxu0 %v192
  %268 = vmatpush1.msra.mxu0 %v191
  %269 = vmatprep.subr.mxu0 %v194
  %270 = vmatpush1.msra.mxu0 %v193
  %271 = vmatprep.subr.mxu0 %v196
  %272 = vmatpush1.msra.mxu0 %v195
  %273 = vmatprep.subr.mxu0 %v198
  %274 = vmatpush1.msra.mxu0 %v197
  %275 = vmatprep.subr.mxu0 %v200
  %276 = vmatpush1.msra.mxu0 %v199
  %277 = vmatprep.subr.mxu0 %v202
  %278 = vmatpush1.msra.mxu0 %v201
  %279 = vmatprep.subr.mxu0 %v204
  %280 = vmatpush1.msra.mxu0 %v203
  %281 = vmatprep.subr.mxu0 %v206
  %282 = vmatpush1.msra.mxu0 %v205
  %283 = vmatprep.mubr.f32.mxu0 %v140
  %284 = vmatmul.mubr.f32.gmra.mrb[0].mxu0 %v139
  %v285 = vpop.f32.mrb[0].mxu0
  %v286 = vadd.f32 %v212, %v285
  %v287 = vpop.f32.mrb[0].mxu0
  %v288 = vadd.f32 %v216, %v287
  %289 = vmatprep.mubr.f32.mxu0 %v142
  %290 = vmatmul.mubr.f32.gmra.mrb[0].mxu0 %v141
  %v291 = vpop.f32.mrb[0].mxu0
  %v292 = vadd.f32 %v212, %v291
  %v293 = vpop.f32.mrb[0].mxu0
  %v294 = vadd.f32 %v216, %v293
  %295 = vdwg.mxu0
  %v296 = vld [vmem:[%s4] sm:$0xff]
  %v297 = vld [vmem:[%s4 + $0x8] sm:$0xff]
  %v298 = vld [vmem:[%s4 + $0x10] sm:$0xff]
  %v299 = vld [vmem:[%s4 + $0x18] sm:$0xff]
  %v300 = vld [vmem:[%s4 + $0x20] sm:$0xff]
  %v301 = vld [vmem:[%s4 + $0x28] sm:$0xff]
  %v302 = vld [vmem:[%s4 + $0x30] sm:$0xff]
  %v303 = vld [vmem:[%s4 + $0x38] sm:$0xff]
  %v304 = vld [vmem:[%s4 + $0x40] sm:$0xff]
  %v305 = vld [vmem:[%s4 + $0x48] sm:$0xff]
  %v306 = vld [vmem:[%s4 + $0x50] sm:$0xff]
  %v307 = vld [vmem:[%s4 + $0x58] sm:$0xff]
  %v308 = vld [vmem:[%s4 + $0x60] sm:$0xff]
  %v309 = vld [vmem:[%s4 + $0x68] sm:$0xff]
  %v310 = vld [vmem:[%s4 + $0x70] sm:$0xff]
  %v311 = vld [vmem:[%s4 + $0x78] sm:$0xff]
  %v312 = vld [vmem:[%s4 + $0x80] sm:$0xff]
  %v313 = vld [vmem:[%s4 + $0x88] sm:$0xff]
  %v314 = vld [vmem:[%s4 + $0x90] sm:$0xff]
  %v315 = vld [vmem:[%s4 + $0x98] sm:$0xff]
  %v316 = vld [vmem:[%s4 + $0xa0] sm:$0xff]
  %v317 = vld [vmem:[%s4 + $0xa8] sm:$0xff]
  %v318 = vld [vmem:[%s4 + $0xb0] sm:$0xff]
  %v319 = vld [vmem:[%s4 + $0xb8] sm:$0xff]
  %v320 = vld [vmem:[%s4 + $0xc0] sm:$0xff]
  %v321 = vld [vmem:[%s4 + $0xc8] sm:$0xff]
  %v322 = vld [vmem:[%s4 + $0xd0] sm:$0xff]
  %v323 = vld [vmem:[%s4 + $0xd8] sm:$0xff]
  %v324 = vld [vmem:[%s4 + $0xe0] sm:$0xff]
  %v325 = vld [vmem:[%s4 + $0xe8] sm:$0xff]
  %v326 = vld [vmem:[%s4 + $0xf0] sm:$0xff]
  %v327 = vld [vmem:[%s4 + $0xf8] sm:$0xff]
  %v328 = vld [vmem:[%s4 + $0x100] sm:$0xff]
  %v329 = vld [vmem:[%s4 + $0x108] sm:$0xff]
  %v330 = vld [vmem:[%s4 + $0x110] sm:$0xff]
  %v331 = vld [vmem:[%s4 + $0x118] sm:$0xff]
  %v332 = vld [vmem:[%s4 + $0x120] sm:$0xff]
  %v333 = vld [vmem:[%s4 + $0x128] sm:$0xff]
  %v334 = vld [vmem:[%s4 + $0x130] sm:$0xff]
  %v335 = vld [vmem:[%s4 + $0x138] sm:$0xff]
  %v336 = vld [vmem:[%s4 + $0x140] sm:$0xff]
  %v337 = vld [vmem:[%s4 + $0x148] sm:$0xff]
  %v338 = vld [vmem:[%s4 + $0x150] sm:$0xff]
  %v339 = vld [vmem:[%s4 + $0x158] sm:$0xff]
  %v340 = vld [vmem:[%s4 + $0x160] sm:$0xff]
  %v341 = vld [vmem:[%s4 + $0x168] sm:$0xff]
  %v342 = vld [vmem:[%s4 + $0x170] sm:$0xff]
  %v343 = vld [vmem:[%s4 + $0x178] sm:$0xff]
  %v344 = vld [vmem:[%s4 + $0x180] sm:$0xff]
  %v345 = vld [vmem:[%s4 + $0x188] sm:$0xff]
  %v346 = vld [vmem:[%s4 + $0x190] sm:$0xff]
  %v347 = vld [vmem:[%s4 + $0x198] sm:$0xff]
  %v348 = vld [vmem:[%s4 + $0x1a0] sm:$0xff]
  %v349 = vld [vmem:[%s4 + $0x1a8] sm:$0xff]
  %v350 = vld [vmem:[%s4 + $0x1b0] sm:$0xff]
  %v351 = vld [vmem:[%s4 + $0x1b8] sm:$0xff]
  %v352 = vld [vmem:[%s4 + $0x1c0] sm:$0xff]
  %v353 = vld [vmem:[%s4 + $0x1c8] sm:$0xff]
  %v354 = vld [vmem:[%s4 + $0x1d0] sm:$0xff]
  %v355 = vld [vmem:[%s4 + $0x1d8] sm:$0xff]
  %v356 = vld [vmem:[%s4 + $0x1e0] sm:$0xff]
  %v357 = vld [vmem:[%s4 + $0x1e8] sm:$0xff]
  %v358 = vld [vmem:[%s4 + $0x1f0] sm:$0xff]
  %v359 = vld [vmem:[%s4 + $0x1f8] sm:$0xff]
  %360 = vmatprep.subr.mxu0 %v297
  %361 = vmatpush1.msra.mxu0 %v296
  %362 = vmatprep.subr.mxu0 %v299
  %363 = vmatpush1.msra.mxu0 %v298
  %364 = vmatprep.subr.mxu0 %v301
  %365 = vmatpush1.msra.mxu0 %v300
  %366 = vmatprep.subr.mxu0 %v303
  %367 = vmatpush1.msra.mxu0 %v302
  %368 = vmatprep.subr.mxu0 %v305
  %369 = vmatpush1.msra.mxu0 %v304
  %370 = vmatprep.subr.mxu0 %v307
  %371 = vmatpush1.msra.mxu0 %v306
  %372 = vmatprep.subr.mxu0 %v309
  %373 = vmatpush1.msra.mxu0 %v308
  %374 = vmatprep.subr.mxu0 %v311
  %375 = vmatpush1.msra.mxu0 %v310
  %376 = vmatprep.subr.mxu0 %v313
  %377 = vmatpush1.msra.mxu0 %v312
  %378 = vmatprep.subr.mxu0 %v315
  %379 = vmatpush1.msra.mxu0 %v314
  %380 = vmatprep.subr.mxu0 %v317
  %381 = vmatpush1.msra.mxu0 %v316
  %382 = vmatprep.subr.mxu0 %v319
  %383 = vmatpush1.msra.mxu0 %v318
  %384 = vmatprep.subr.mxu0 %v321
  %385 = vmatpush1.msra.mxu0 %v320
  %386 = vmatprep.subr.mxu0 %v323
  %387 = vmatpush1.msra.mxu0 %v322
  %388 = vmatprep.subr.mxu0 %v325
  %389 = vmatpush1.msra.mxu0 %v324
  %390 = vmatprep.subr.mxu0 %v327
  %391 = vmatpush1.msra.mxu0 %v326
  %392 = vmatprep.subr.mxu0 %v329
  %393 = vmatpush1.msra.mxu0 %v328
  %394 = vmatprep.subr.mxu0 %v331
  %395 = vmatpush1.msra.mxu0 %v330
  %396 = vmatprep.subr.mxu0 %v333
  %397 = vmatpush1.msra.mxu0 %v332
  %398 = vmatprep.subr.mxu0 %v335
  %399 = vmatpush1.msra.mxu0 %v334
  %400 = vmatprep.subr.mxu0 %v337
  %401 = vmatpush1.msra.mxu0 %v336
  %402 = vmatprep.subr.mxu0 %v339
  %403 = vmatpush1.msra.mxu0 %v338
  %404 = vmatprep.subr.mxu0 %v341
  %405 = vmatpush1.msra.mxu0 %v340
  %406 = vmatprep.subr.mxu0 %v343
  %407 = vmatpush1.msra.mxu0 %v342
  %408 = vmatprep.subr.mxu0 %v345
  %409 = vmatpush1.msra.mxu0 %v344
  %410 = vmatprep.subr.mxu0 %v347
  %411 = vmatpush1.msra.mxu0 %v346
  %412 = vmatprep.subr.mxu0 %v349
  %413 = vmatpush1.msra.mxu0 %v348
  %414 = vmatprep.subr.mxu0 %v351
  %415 = vmatpush1.msra.mxu0 %v350
  %416 = vmatprep.subr.mxu0 %v353
  %417 = vmatpush1.msra.mxu0 %v352
  %418 = vmatprep.subr.mxu0 %v355
  %419 = vmatpush1.msra.mxu0 %v354
  %420 = vmatprep.subr.mxu0 %v357
  %421 = vmatpush1.msra.mxu0 %v356
  %422 = vmatprep.subr.mxu0 %v359
  %423 = vmatpush1.msra.mxu0 %v358
  %424 = vmatprep.mubr.f32.mxu0 0.0
  %425 = vmatmul.mubr.f32.gmra.mrb[0].mxu0 0.0
  %v426 = vpop.f32.mrb[0].mxu0
  %v427 = vadd.f32 0.0, %v426
  %v428 = vpop.f32.mrb[0].mxu0
  %v429 = vadd.f32 0.0, %v428
  %430 = vdwg.mxu0
  %v431 = vadd.f32 %v286, %v427
  %v432 = vadd.f32 %v288, %v429
  %v433 = vtanh.pop %v431
  %v434 = vtanh.pop %v432
  %435 = vmatprep.subr.mxu0 %v297
  %436 = vmatpush1.msra.mxu0 %v296
  %437 = vmatprep.subr.mxu0 %v299
  %438 = vmatpush1.msra.mxu0 %v298
  %439 = vmatprep.subr.mxu0 %v301
  %440 = vmatpush1.msra.mxu0 %v300
  %441 = vmatprep.subr.mxu0 %v303
  %442 = vmatpush1.msra.mxu0 %v302
  %443 = vmatprep.subr.mxu0 %v305
  %444 = vmatpush1.msra.mxu0 %v304
  %445 = vmatprep.subr.mxu0 %v307
  %446 = vmatpush1.msra.mxu0 %v306
  %447 = vmatprep.subr.mxu0 %v309
  %448 = vmatpush1.msra.mxu0 %v308
  %449 = vmatprep.subr.mxu0 %v311
  %450 = vmatpush1.msra.mxu0 %v310
  %451 = vmatprep.subr.mxu0 %v313
  %452 = vmatpush1.msra.mxu0 %v312
  %453 = vmatprep.subr.mxu0 %v315
  %454 = vmatpush1.msra.mxu0 %v314
  %455 = vmatprep.subr.mxu0 %v317
  %456 = vmatpush1.msra.mxu0 %v316
  %457 = vmatprep.subr.mxu0 %v319
  %458 = vmatpush1.msra.mxu0 %v318
  %459 = vmatprep.subr.mxu0 %v321
  %460 = vmatpush1.msra.mxu0 %v320
  %461 = vmatprep.subr.mxu0 %v323
  %462 = vmatpush1.msra.mxu0 %v322
  %463 = vmatprep.subr.mxu0 %v325
  %464 = vmatpush1.msra.mxu0 %v324
  %465 = vmatprep.subr.mxu0 %v327
  %466 = vmatpush1.msra.mxu0 %v326
  %467 = vmatprep.subr.mxu0 %v329
  %468 = vmatpush1.msra.mxu0 %v328
  %469 = vmatprep.subr.mxu0 %v331
  %470 = vmatpush1.msra.mxu0 %v330
  %471 = vmatprep.subr.mxu0 %v333
  %472 = vmatpush1.msra.mxu0 %v332
  %473 = vmatprep.subr.mxu0 %v335
  %474 = vmatpush1.msra.mxu0 %v334
  %475 = vmatprep.subr.mxu0 %v337
  %476 = vmatpush1.msra.mxu0 %v336
  %477 = vmatprep.subr.mxu0 %v339
  %478 = vmatpush1.msra.mxu0 %v338
  %479 = vmatprep.subr.mxu0 %v341
  %480 = vmatpush1.msra.mxu0 %v340
  %481 = vmatprep.subr.mxu0 %v343
  %482 = vmatpush1.msra.mxu0 %v342
  %483 = vmatprep.subr.mxu0 %v345
  %484 = vmatpush1.msra.mxu0 %v344
  %485 = vmatprep.subr.mxu0 %v347
  %486 = vmatpush1.msra.mxu0 %v346
  %487 = vmatprep.subr.mxu0 %v349
  %488 = vmatpush1.msra.mxu0 %v348
  %489 = vmatprep.subr.mxu0 %v351
  %490 = vmatpush1.msra.mxu0 %v350
  %491 = vmatprep.subr.mxu0 %v353
  %492 = vmatpush1.msra.mxu0 %v352
  %493 = vmatprep.subr.mxu0 %v355
  %494 = vmatpush1.msra.mxu0 %v354
  %495 = vmatprep.subr.mxu0 %v357
  %496 = vmatpush1.msra.mxu0 %v356
  %497 = vmatprep.subr.mxu0 %v359
  %498 = vmatpush1.msra.mxu0 %v358
  %499 = vmatprep.mubr.f32.mxu0 %v434
  %500 = vmatmul.mubr.f32.gmra.mrb[0].mxu0 %v433
  %v501 = vpop.f32.mrb[0].mxu0
  %v502 = vadd.f32 0.0, %v501
  %v503 = vpop.f32.mrb[0].mxu0
  %v504 = vadd.f32 0.0, %v503
  %505 = vdwg.mxu0
  %v508 = vrot.slane %v502, 6
  %v509 = vrot.slane %v504, 6
  %v512 = vadd.f32 %v286, %v508
  %v513 = vadd.f32 %v288, %v509
  %v514 = vtanh.pop %v512
  %v515 = vtanh.pop %v513
  %v518 = vrot.slane %v514, 2
  %v519 = vrot.slane %v515, 2
  %522 = vmatprep.subr.mxu0 %v297
  %523 = vmatpush1.msra.mxu0 %v296
  %524 = vmatprep.subr.mxu0 %v299
  %525 = vmatpush1.msra.mxu0 %v298
  %526 = vmatprep.subr.mxu0 %v301
  %527 = vmatpush1.msra.mxu0 %v300
  %528 = vmatprep.subr.mxu0 %v303
  %529 = vmatpush1.msra.mxu0 %v302
  %530 = vmatprep.subr.mxu0 %v305
  %531 = vmatpush1.msra.mxu0 %v304
  %532 = vmatprep.subr.mxu0 %v307
  %533 = vmatpush1.msra.mxu0 %v306
  %534 = vmatprep.subr.mxu0 %v309
  %535 = vmatpush1.msra.mxu0 %v308
  %536 = vmatprep.subr.mxu0 %v311
  %537 = vmatpush1.msra.mxu0 %v310
  %538 = vmatprep.subr.mxu0 %v313
  %539 = vmatpush1.msra.mxu0 %v312
  %540 = vmatprep.subr.mxu0 %v315
  %541 = vmatpush1.msra.mxu0 %v314
  %542 = vmatprep.subr.mxu0 %v317
  %543 = vmatpush1.msra.mxu0 %v316
  %544 = vmatprep.subr.mxu0 %v319
  %545 = vmatpush1.msra.mxu0 %v318
  %546 = vmatprep.subr.mxu0 %v321
  %547 = vmatpush1.msra.mxu0 %v320
  %548 = vmatprep.subr.mxu0 %v323
  %549 = vmatpush1.msra.mxu0 %v322
  %550 = vmatprep.subr.mxu0 %v325
  %551 = vmatpush1.msra.mxu0 %v324
  %552 = vmatprep.subr.mxu0 %v327
  %553 = vmatpush1.msra.mxu0 %v326
  %554 = vmatprep.subr.mxu0 %v329
  %555 = vmatpush1.msra.mxu0 %v328
  %556 = vmatprep.subr.mxu0 %v331
  %557 = vmatpush1.msra.mxu0 %v330
  %558 = vmatprep.subr.mxu0 %v333
  %559 = vmatpush1.msra.mxu0 %v332
  %560 = vmatprep.subr.mxu0 %v335
  %561 = vmatpush1.msra.mxu0 %v334
  %562 = vmatprep.subr.mxu0 %v337
  %563 = vmatpush1.msra.mxu0 %v336
  %564 = vmatprep.subr.mxu0 %v339
  %565 = vmatpush1.msra.mxu0 %v338
  %566 = vmatprep.subr.mxu0 %v341
  %567 = vmatpush1.msra.mxu0 %v340
  %568 = vmatprep.subr.mxu0 %v343
  %569 = vmatpush1.msra.mxu0 %v342
  %570 = vmatprep.subr.mxu0 %v345
  %571 = vmatpush1.msra.mxu0 %v344
  %572 = vmatprep.subr.mxu0 %v347
  %573 = vmatpush1.msra.mxu0 %v346
  %574 = vmatprep.subr.mxu0 %v349
  %575 = vmatpush1.msra.mxu0 %v348
  %576 = vmatprep.subr.mxu0 %v351
  %577 = vmatpush1.msra.mxu0 %v350
  %578 = vmatprep.subr.mxu0 %v353
  %579 = vmatpush1.msra.mxu0 %v352
  %580 = vmatprep.subr.mxu0 %v355
  %581 = vmatpush1.msra.mxu0 %v354
  %582 = vmatprep.subr.mxu0 %v357
  %583 = vmatpush1.msra.mxu0 %v356
  %584 = vmatprep.subr.mxu0 %v359
  %585 = vmatpush1.msra.mxu0 %v358
  %586 = vmatprep.mubr.f32.mxu0 %v519
  %587 = vmatmul.mubr.f32.gmra.mrb[0].mxu0 %v518
  %v588 = vpop.f32.mrb[0].mxu0
  %v589 = vadd.f32 0.0, %v588
  %v590 = vpop.f32.mrb[0].mxu0
  %v591 = vadd.f32 0.0, %v590
  %592 = vdwg.mxu0
  %v595 = vrot.slane %v589, 4
  %v596 = vrot.slane %v591, 4
  %v599 = vadd.f32 %v286, %v595
  %v600 = vadd.f32 %v288, %v596
  %v601 = vtanh.pop %v599
  %v602 = vtanh.pop %v600
  %v605 = vrot.slane %v601, 4
  %v606 = vrot.slane %v602, 4
  %609 = vmatprep.subr.mxu0 %v297
  %610 = vmatpush1.msra.mxu0 %v296
  %611 = vmatprep.subr.mxu0 %v299
  %612 = vmatpush1.msra.mxu0 %v298
  %613 = vmatprep.subr.mxu0 %v301
  %614 = vmatpush1.msra.mxu0 %v300
  %615 = vmatprep.subr.mxu0 %v303
  %616 = vmatpush1.msra.mxu0 %v302
  %617 = vmatprep.subr.mxu0 %v305
  %618 = vmatpush1.msra.mxu0 %v304
  %619 = vmatprep.subr.mxu0 %v307
  %620 = vmatpush1.msra.mxu0 %v306
  %621 = vmatprep.subr.mxu0 %v309
  %622 = vmatpush1.msra.mxu0 %v308
  %623 = vmatprep.subr.mxu0 %v311
  %624 = vmatpush1.msra.mxu0 %v310
  %625 = vmatprep.subr.mxu0 %v313
  %626 = vmatpush1.msra.mxu0 %v312
  %627 = vmatprep.subr.mxu0 %v315
  %628 = vmatpush1.msra.mxu0 %v314
  %629 = vmatprep.subr.mxu0 %v317
  %630 = vmatpush1.msra.mxu0 %v316
  %631 = vmatprep.subr.mxu0 %v319
  %632 = vmatpush1.msra.mxu0 %v318
  %633 = vmatprep.subr.mxu0 %v321
  %634 = vmatpush1.msra.mxu0 %v320
  %635 = vmatprep.subr.mxu0 %v323
  %636 = vmatpush1.msra.mxu0 %v322
  %637 = vmatprep.subr.mxu0 %v325
  %638 = vmatpush1.msra.mxu0 %v324
  %639 = vmatprep.subr.mxu0 %v327
  %640 = vmatpush1.msra.mxu0 %v326
  %641 = vmatprep.subr.mxu0 %v329
  %642 = vmatpush1.msra.mxu0 %v328
  %643 = vmatprep.subr.mxu0 %v331
  %644 = vmatpush1.msra.mxu0 %v330
  %645 = vmatprep.subr.mxu0 %v333
  %646 = vmatpush1.msra.mxu0 %v332
  %647 = vmatprep.subr.mxu0 %v335
  %648 = vmatpush1.msra.mxu0 %v334
  %649 = vmatprep.subr.mxu0 %v337
  %650 = vmatpush1.msra.mxu0 %v336
  %651 = vmatprep.subr.mxu0 %v339
  %652 = vmatpush1.msra.mxu0 %v338
  %653 = vmatprep.subr.mxu0 %v341
  %654 = vmatpush1.msra.mxu0 %v340
  %655 = vmatprep.subr.mxu0 %v343
  %656 = vmatpush1.msra.mxu0 %v342
  %657 = vmatprep.subr.mxu0 %v345
  %658 = vmatpush1.msra.mxu0 %v344
  %659 = vmatprep.subr.mxu0 %v347
  %660 = vmatpush1.msra.mxu0 %v346
  %661 = vmatprep.subr.mxu0 %v349
  %662 = vmatpush1.msra.mxu0 %v348
  %663 = vmatprep.subr.mxu0 %v351
  %664 = vmatpush1.msra.mxu0 %v350
  %665 = vmatprep.subr.mxu0 %v353
  %666 = vmatpush1.msra.mxu0 %v352
  %667 = vmatprep.subr.mxu0 %v355
  %668 = vmatpush1.msra.mxu0 %v354
  %669 = vmatprep.subr.mxu0 %v357
  %670 = vmatpush1.msra.mxu0 %v356
  %671 = vmatprep.subr.mxu0 %v359
  %672 = vmatpush1.msra.mxu0 %v358
  %673 = vmatprep.mubr.f32.mxu0 %v606
  %674 = vmatmul.mubr.f32.gmra.mrb[0].mxu0 %v605
  %v675 = vpop.f32.mrb[0].mxu0
  %v676 = vadd.f32 0.0, %v675
  %v677 = vpop.f32.mrb[0].mxu0
  %v678 = vadd.f32 0.0, %v677
  %679 = vdwg.mxu0
  %v682 = vrot.slane %v676, 2
  %v683 = vrot.slane %v678, 2
  %v686 = vadd.f32 %v286, %v682
  %v687 = vadd.f32 %v288, %v683
  %v688 = vtanh.pop %v686
  %v689 = vtanh.pop %v687
  %v692 = vrot.slane %v688, 6
  %v693 = vrot.slane %v689, 6
  %696 = vmatprep.subr.mxu0 %v297
  %697 = vmatpush1.msra.mxu0 %v296
  %698 = vmatprep.subr.mxu0 %v299
  %699 = vmatpush1.msra.mxu0 %v298
  %700 = vmatprep.subr.mxu0 %v301
  %701 = vmatpush1.msra.mxu0 %v300
  %702 = vmatprep.subr.mxu0 %v303
  %703 = vmatpush1.msra.mxu0 %v302
  %704 = vmatprep.subr.mxu0 %v305
  %705 = vmatpush1.msra.mxu0 %v304
  %706 = vmatprep.subr.mxu0 %v307
  %707 = vmatpush1.msra.mxu0 %v306
  %708 = vmatprep.subr.mxu0 %v309
  %709 = vmatpush1.msra.mxu0 %v308
  %710 = vmatprep.subr.mxu0 %v311
  %711 = vmatpush1.msra.mxu0 %v310
  %712 = vmatprep.subr.mxu0 %v313
  %713 = vmatpush1.msra.mxu0 %v312
  %714 = vmatprep.subr.mxu0 %v315
  %715 = vmatpush1.msra.mxu0 %v314
  %716 = vmatprep.subr.mxu0 %v317
  %717 = vmatpush1.msra.mxu0 %v316
  %718 = vmatprep.subr.mxu0 %v319
  %719 = vmatpush1.msra.mxu0 %v318
  %720 = vmatprep.subr.mxu0 %v321
  %721 = vmatpush1.msra.mxu0 %v320
  %722 = vmatprep.subr.mxu0 %v323
  %723 = vmatpush1.msra.mxu0 %v322
  %724 = vmatprep.subr.mxu0 %v325
  %725 = vmatpush1.msra.mxu0 %v324
  %726 = vmatprep.subr.mxu0 %v327
  %727 = vmatpush1.msra.mxu0 %v326
  %728 = vmatprep.subr.mxu0 %v329
  %729 = vmatpush1.msra.mxu0 %v328
  %730 = vmatprep.subr.mxu0 %v331
  %731 = vmatpush1.msra.mxu0 %v330
  %732 = vmatprep.subr.mxu0 %v333
  %733 = vmatpush1.msra.mxu0 %v332
  %734 = vmatprep.subr.mxu0 %v335
  %735 = vmatpush1.msra.mxu0 %v334
  %736 = vmatprep.subr.mxu0 %v337
  %737 = vmatpush1.msra.mxu0 %v336
  %738 = vmatprep.subr.mxu0 %v339
  %739 = vmatpush1.msra.mxu0 %v338
  %740 = vmatprep.subr.mxu0 %v341
  %741 = vmatpush1.msra.mxu0 %v340
  %742 = vmatprep.subr.mxu0 %v343
  %743 = vmatpush1.msra.mxu0 %v342
  %744 = vmatprep.subr.mxu0 %v345
  %745 = vmatpush1.msra.mxu0 %v344
  %746 = vmatprep.subr.mxu0 %v347
  %747 = vmatpush1.msra.mxu0 %v346
  %748 = vmatprep.subr.mxu0 %v349
  %749 = vmatpush1.msra.mxu0 %v348
  %750 = vmatprep.subr.mxu0 %v351
  %751 = vmatpush1.msra.mxu0 %v350
  %752 = vmatprep.subr.mxu0 %v353
  %753 = vmatpush1.msra.mxu0 %v352
  %754 = vmatprep.subr.mxu0 %v355
  %755 = vmatpush1.msra.mxu0 %v354
  %756 = vmatprep.subr.mxu0 %v357
  %757 = vmatpush1.msra.mxu0 %v356
  %758 = vmatprep.subr.mxu0 %v359
  %759 = vmatpush1.msra.mxu0 %v358
  %760 = vmatprep.mubr.f32.mxu0 %v693
  %761 = vmatmul.mubr.f32.gmra.mrb[0].mxu0 %v692
  %v762 = vpop.f32.mrb[0].mxu0
  %v763 = vadd.f32 0.0, %v762
  %v764 = vpop.f32.mrb[0].mxu0
  %v765 = vadd.f32 0.0, %v764
  %766 = vdwg.mxu0
  %v767 = vadd.f32 %v292, %v763
  %v768 = vadd.f32 %v294, %v765
  %v769 = vtanh.pop %v767
  %v770 = vtanh.pop %v768
  %771 = vmatprep.subr.mxu0 %v297
  %772 = vmatpush1.msra.mxu0 %v296
  %773 = vmatprep.subr.mxu0 %v299
  %774 = vmatpush1.msra.mxu0 %v298
  %775 = vmatprep.subr.mxu0 %v301
  %776 = vmatpush1.msra.mxu0 %v300
  %777 = vmatprep.subr.mxu0 %v303
  %778 = vmatpush1.msra.mxu0 %v302
  %779 = vmatprep.subr.mxu0 %v305
  %780 = vmatpush1.msra.mxu0 %v304
  %781 = vmatprep.subr.mxu0 %v307
  %782 = vmatpush1.msra.mxu0 %v306
  %783 = vmatprep.subr.mxu0 %v309
  %784 = vmatpush1.msra.mxu0 %v308
  %785 = vmatprep.subr.mxu0 %v311
  %786 = vmatpush1.msra.mxu0 %v310
  %787 = vmatprep.subr.mxu0 %v313
  %788 = vmatpush1.msra.mxu0 %v312
  %789 = vmatprep.subr.mxu0 %v315
  %790 = vmatpush1.msra.mxu0 %v314
  %791 = vmatprep.subr.mxu0 %v317
  %792 = vmatpush1.msra.mxu0 %v316
  %793 = vmatprep.subr.mxu0 %v319
  %794 = vmatpush1.msra.mxu0 %v318
  %795 = vmatprep.subr.mxu0 %v321
  %796 = vmatpush1.msra.mxu0 %v320
  %797 = vmatprep.subr.mxu0 %v323
  %798 = vmatpush1.msra.mxu0 %v322
  %799 = vmatprep.subr.mxu0 %v325
  %800 = vmatpush1.msra.mxu0 %v324
  %801 = vmatprep.subr.mxu0 %v327
  %802 = vmatpush1.msra.mxu0 %v326
  %803 = vmatprep.subr.mxu0 %v329
  %804 = vmatpush1.msra.mxu0 %v328
  %805 = vmatprep.subr.mxu0 %v331
  %806 = vmatpush1.msra.mxu0 %v330
  %807 = vmatprep.subr.mxu0 %v333
  %808 = vmatpush1.msra.mxu0 %v332
  %809 = vmatprep.subr.mxu0 %v335
  %810 = vmatpush1.msra.mxu0 %v334
  %811 = vmatprep.subr.mxu0 %v337
  %812 = vmatpush1.msra.mxu0 %v336
  %813 = vmatprep.subr.mxu0 %v339
  %814 = vmatpush1.msra.mxu0 %v338
  %815 = vmatprep.subr.mxu0 %v341
  %816 = vmatpush1.msra.mxu0 %v340
  %817 = vmatprep.subr.mxu0 %v343
  %818 = vmatpush1.msra.mxu0 %v342
  %819 = vmatprep.subr.mxu0 %v345
  %820 = vmatpush1.msra.mxu0 %v344
  %821 = vmatprep.subr.mxu0 %v347
  %822 = vmatpush1.msra.mxu0 %v346
  %823 = vmatprep.subr.mxu0 %v349
  %824 = vmatpush1.msra.mxu0 %v348
  %825 = vmatprep.subr.mxu0 %v351
  %826 = vmatpush1.msra.mxu0 %v350
  %827 = vmatprep.subr.mxu0 %v353
  %828 = vmatpush1.msra.mxu0 %v352
  %829 = vmatprep.subr.mxu0 %v355
  %830 = vmatpush1.msra.mxu0 %v354
  %831 = vmatprep.subr.mxu0 %v357
  %832 = vmatpush1.msra.mxu0 %v356
  %833 = vmatprep.subr.mxu0 %v359
  %834 = vmatpush1.msra.mxu0 %v358
  %835 = vmatprep.mubr.f32.mxu0 %v770
  %836 = vmatmul.mubr.f32.gmra.mrb[0].mxu0 %v769
  %v837 = vpop.f32.mrb[0].mxu0
  %v838 = vadd.f32 0.0, %v837
  %v839 = vpop.f32.mrb[0].mxu0
  %v840 = vadd.f32 0.0, %v839
  %841 = vdwg.mxu0
  %v844 = vrot.slane %v838, 6
  %v845 = vrot.slane %v840, 6
  %v848 = vadd.f32 %v292, %v844
  %v849 = vadd.f32 %v294, %v845
  %v850 = vtanh.pop %v848
  %v851 = vtanh.pop %v849
  %v854 = vrot.slane %v850, 2
  %v855 = vrot.slane %v851, 2
  %858 = vmatprep.subr.mxu0 %v297
  %859 = vmatpush1.msra.mxu0 %v296
  %860 = vmatprep.subr.mxu0 %v299
  %861 = vmatpush1.msra.mxu0 %v298
  %862 = vmatprep.subr.mxu0 %v301
  %863 = vmatpush1.msra.mxu0 %v300
  %864 = vmatprep.subr.mxu0 %v303
  %865 = vmatpush1.msra.mxu0 %v302
  %866 = vmatprep.subr.mxu0 %v305
  %867 = vmatpush1.msra.mxu0 %v304
  %868 = vmatprep.subr.mxu0 %v307
  %869 = vmatpush1.msra.mxu0 %v306
  %870 = vmatprep.subr.mxu0 %v309
  %871 = vmatpush1.msra.mxu0 %v308
  %872 = vmatprep.subr.mxu0 %v311
  %873 = vmatpush1.msra.mxu0 %v310
  %874 = vmatprep.subr.mxu0 %v313
  %875 = vmatpush1.msra.mxu0 %v312
  %876 = vmatprep.subr.mxu0 %v315
  %877 = vmatpush1.msra.mxu0 %v314
  %878 = vmatprep.subr.mxu0 %v317
  %879 = vmatpush1.msra.mxu0 %v316
  %880 = vmatprep.subr.mxu0 %v319
  %881 = vmatpush1.msra.mxu0 %v318
  %882 = vmatprep.subr.mxu0 %v321
  %883 = vmatpush1.msra.mxu0 %v320
  %884 = vmatprep.subr.mxu0 %v323
  %885 = vmatpush1.msra.mxu0 %v322
  %886 = vmatprep.subr.mxu0 %v325
  %887 = vmatpush1.msra.mxu0 %v324
  %888 = vmatprep.subr.mxu0 %v327
  %889 = vmatpush1.msra.mxu0 %v326
  %890 = vmatprep.subr.mxu0 %v329
  %891 = vmatpush1.msra.mxu0 %v328
  %892 = vmatprep.subr.mxu0 %v331
  %893 = vmatpush1.msra.mxu0 %v330
  %894 = vmatprep.subr.mxu0 %v333
  %895 = vmatpush1.msra.mxu0 %v332
  %896 = vmatprep.subr.mxu0 %v335
  %897 = vmatpush1.msra.mxu0 %v334
  %898 = vmatprep.subr.mxu0 %v337
  %899 = vmatpush1.msra.mxu0 %v336
  %900 = vmatprep.subr.mxu0 %v339
  %901 = vmatpush1.msra.mxu0 %v338
  %902 = vmatprep.subr.mxu0 %v341
  %903 = vmatpush1.msra.mxu0 %v340
  %904 = vmatprep.subr.mxu0 %v343
  %905 = vmatpush1.msra.mxu0 %v342
  %906 = vmatprep.subr.mxu0 %v345
  %907 = vmatpush1.msra.mxu0 %v344
  %908 = vmatprep.subr.mxu0 %v347
  %909 = vmatpush1.msra.mxu0 %v346
  %910 = vmatprep.subr.mxu0 %v349
  %911 = vmatpush1.msra.mxu0 %v348
  %912 = vmatprep.subr.mxu0 %v351
  %913 = vmatpush1.msra.mxu0 %v350
  %914 = vmatprep.subr.mxu0 %v353
  %915 = vmatpush1.msra.mxu0 %v352
  %916 = vmatprep.subr.mxu0 %v355
  %917 = vmatpush1.msra.mxu0 %v354
  %918 = vmatprep.subr.mxu0 %v357
  %919 = vmatpush1.msra.mxu0 %v356
  %920 = vmatprep.subr.mxu0 %v359
  %921 = vmatpush1.msra.mxu0 %v358
  %922 = vmatprep.mubr.f32.mxu0 %v855
  %923 = vmatmul.mubr.f32.gmra.mrb[0].mxu0 %v854
  %v924 = vpop.f32.mrb[0].mxu0
  %v925 = vadd.f32 0.0, %v924
  %v926 = vpop.f32.mrb[0].mxu0
  %v927 = vadd.f32 0.0, %v926
  %928 = vdwg.mxu0
  %v931 = vrot.slane %v925, 4
  %v932 = vrot.slane %v927, 4
  %v935 = vadd.f32 %v292, %v931
  %v936 = vadd.f32 %v294, %v932
  %v937 = vtanh.pop %v935
  %v938 = vtanh.pop %v936
  %v941 = vrot.slane %v937, 4
  %v942 = vrot.slane %v938, 4
  %945 = vmatprep.subr.mxu0 %v297
  %946 = vmatpush1.msra.mxu0 %v296
  %947 = vmatprep.subr.mxu0 %v299
  %948 = vmatpush1.msra.mxu0 %v298
  %949 = vmatprep.subr.mxu0 %v301
  %950 = vmatpush1.msra.mxu0 %v300
  %951 = vmatprep.subr.mxu0 %v303
  %952 = vmatpush1.msra.mxu0 %v302
  %953 = vmatprep.subr.mxu0 %v305
  %954 = vmatpush1.msra.mxu0 %v304
  %955 = vmatprep.subr.mxu0 %v307
  %956 = vmatpush1.msra.mxu0 %v306
  %957 = vmatprep.subr.mxu0 %v309
  %958 = vmatpush1.msra.mxu0 %v308
  %959 = vmatprep.subr.mxu0 %v311
  %960 = vmatpush1.msra.mxu0 %v310
  %961 = vmatprep.subr.mxu0 %v313
  %962 = vmatpush1.msra.mxu0 %v312
  %963 = vmatprep.subr.mxu0 %v315
  %964 = vmatpush1.msra.mxu0 %v314
  %965 = vmatprep.subr.mxu0 %v317
  %966 = vmatpush1.msra.mxu0 %v316
  %967 = vmatprep.subr.mxu0 %v319
  %968 = vmatpush1.msra.mxu0 %v318
  %969 = vmatprep.subr.mxu0 %v321
  %970 = vmatpush1.msra.mxu0 %v320
  %971 = vmatprep.subr.mxu0 %v323
  %972 = vmatpush1.msra.mxu0 %v322
  %973 = vmatprep.subr.mxu0 %v325
  %974 = vmatpush1.msra.mxu0 %v324
  %975 = vmatprep.subr.mxu0 %v327
  %976 = vmatpush1.msra.mxu0 %v326
  %977 = vmatprep.subr.mxu0 %v329
  %978 = vmatpush1.msra.mxu0 %v328
  %979 = vmatprep.subr.mxu0 %v331
  %980 = vmatpush1.msra.mxu0 %v330
  %981 = vmatprep.subr.mxu0 %v333
  %982 = vmatpush1.msra.mxu0 %v332
  %983 = vmatprep.subr.mxu0 %v335
  %984 = vmatpush1.msra.mxu0 %v334
  %985 = vmatprep.subr.mxu0 %v337
  %986 = vmatpush1.msra.mxu0 %v336
  %987 = vmatprep.subr.mxu0 %v339
  %988 = vmatpush1.msra.mxu0 %v338
  %989 = vmatprep.subr.mxu0 %v341
  %990 = vmatpush1.msra.mxu0 %v340
  %991 = vmatprep.subr.mxu0 %v343
  %992 = vmatpush1.msra.mxu0 %v342
  %993 = vmatprep.subr.mxu0 %v345
  %994 = vmatpush1.msra.mxu0 %v344
  %995 = vmatprep.subr.mxu0 %v347
  %996 = vmatpush1.msra.mxu0 %v346
  %997 = vmatprep.subr.mxu0 %v349
  %998 = vmatpush1.msra.mxu0 %v348
  %999 = vmatprep.subr.mxu0 %v351
  %1000 = vmatpush1.msra.mxu0 %v350
  %1001 = vmatprep.subr.mxu0 %v353
  %1002 = vmatpush1.msra.mxu0 %v352
  %1003 = vmatprep.subr.mxu0 %v355
  %1004 = vmatpush1.msra.mxu0 %v354
  %1005 = vmatprep.subr.mxu0 %v357
  %1006 = vmatpush1.msra.mxu0 %v356
  %1007 = vmatprep.subr.mxu0 %v359
  %1008 = vmatpush1.msra.mxu0 %v358
  %1009 = vmatprep.mubr.f32.mxu0 %v942
  %1010 = vmatmul.mubr.f32.gmra.mrb[0].mxu0 %v941
  %v1011 = vpop.f32.mrb[0].mxu0
  %v1012 = vadd.f32 0.0, %v1011
  %v1013 = vpop.f32.mrb[0].mxu0
  %v1014 = vadd.f32 0.0, %v1013
  %1015 = vdwg.mxu0
  %v1018 = vrot.slane %v1012, 2
  %v1019 = vrot.slane %v1014, 2
  %v1022 = vadd.f32 %v292, %v1018
  %v1023 = vadd.f32 %v294, %v1019
  %v1024 = vtanh.pop %v1022
  %v1025 = vtanh.pop %v1023
  %v1026 = vld [vmem:[%s6] sm:$0xff]
  %v1027 = vld [vmem:[%s6 + $0x8] sm:$0xff]
  %v1028 = vld [vmem:[%s6 + $0x10] sm:$0xff]
  %v1029 = vld [vmem:[%s6 + $0x18] sm:$0xff]
  %v1030 = vld [vmem:[%s6 + $0x20] sm:$0xff]
  %v1031 = vld [vmem:[%s6 + $0x28] sm:$0xff]
  %v1032 = vld [vmem:[%s6 + $0x30] sm:$0xff]
  %v1033 = vld [vmem:[%s6 + $0x38] sm:$0xff]
  %v1034 = vld [vmem:[%s6 + $0x40] sm:$0xff]
  %v1035 = vld [vmem:[%s6 + $0x48] sm:$0xff]
  %v1036 = vld [vmem:[%s6 + $0x50] sm:$0xff]
  %v1037 = vld [vmem:[%s6 + $0x58] sm:$0xff]
  %v1038 = vld [vmem:[%s6 + $0x60] sm:$0xff]
  %v1039 = vld [vmem:[%s6 + $0x68] sm:$0xff]
  %v1040 = vld [vmem:[%s6 + $0x70] sm:$0xff]
  %v1041 = vld [vmem:[%s6 + $0x78] sm:$0xff]
  %v1042 = vld [vmem:[%s6 + $0x80] sm:$0xff]
  %v1043 = vld [vmem:[%s6 + $0x88] sm:$0xff]
  %v1044 = vld [vmem:[%s6 + $0x90] sm:$0xff]
  %v1045 = vld [vmem:[%s6 + $0x98] sm:$0xff]
  %v1046 = vld [vmem:[%s6 + $0xa0] sm:$0xff]
  %v1047 = vld [vmem:[%s6 + $0xa8] sm:$0xff]
  %v1048 = vld [vmem:[%s6 + $0xb0] sm:$0xff]
  %v1049 = vld [vmem:[%s6 + $0xb8] sm:$0xff]
  %v1050 = vld [vmem:[%s6 + $0xc0] sm:$0xff]
  %v1051 = vld [vmem:[%s6 + $0xc8] sm:$0xff]
  %v1052 = vld [vmem:[%s6 + $0xd0] sm:$0xff]
  %v1053 = vld [vmem:[%s6 + $0xd8] sm:$0xff]
  %v1054 = vld [vmem:[%s6 + $0xe0] sm:$0xff]
  %v1055 = vld [vmem:[%s6 + $0xe8] sm:$0xff]
  %v1056 = vld [vmem:[%s6 + $0xf0] sm:$0xff]
  %v1057 = vld [vmem:[%s6 + $0xf8] sm:$0xff]
  %v1058 = vld [vmem:[%s6 + $0x100] sm:$0xff]
  %v1059 = vld [vmem:[%s6 + $0x108] sm:$0xff]
  %v1060 = vld [vmem:[%s6 + $0x110] sm:$0xff]
  %v1061 = vld [vmem:[%s6 + $0x118] sm:$0xff]
  %v1062 = vld [vmem:[%s6 + $0x120] sm:$0xff]
  %v1063 = vld [vmem:[%s6 + $0x128] sm:$0xff]
  %v1064 = vld [vmem:[%s6 + $0x130] sm:$0xff]
  %v1065 = vld [vmem:[%s6 + $0x138] sm:$0xff]
  %v1066 = vld [vmem:[%s6 + $0x140] sm:$0xff]
  %v1067 = vld [vmem:[%s6 + $0x148] sm:$0xff]
  %v1068 = vld [vmem:[%s6 + $0x150] sm:$0xff]
  %v1069 = vld [vmem:[%s6 + $0x158] sm:$0xff]
  %v1070 = vld [vmem:[%s6 + $0x160] sm:$0xff]
  %v1071 = vld [vmem:[%s6 + $0x168] sm:$0xff]
  %v1072 = vld [vmem:[%s6 + $0x170] sm:$0xff]
  %v1073 = vld [vmem:[%s6 + $0x178] sm:$0xff]
  %v1074 = vld [vmem:[%s6 + $0x180] sm:$0xff]
  %v1075 = vld [vmem:[%s6 + $0x188] sm:$0xff]
  %v1076 = vld [vmem:[%s6 + $0x190] sm:$0xff]
  %v1077 = vld [vmem:[%s6 + $0x198] sm:$0xff]
  %v1078 = vld [vmem:[%s6 + $0x1a0] sm:$0xff]
  %v1079 = vld [vmem:[%s6 + $0x1a8] sm:$0xff]
  %v1080 = vld [vmem:[%s6 + $0x1b0] sm:$0xff]
  %v1081 = vld [vmem:[%s6 + $0x1b8] sm:$0xff]
  %v1082 = vld [vmem:[%s6 + $0x1c0] sm:$0xff]
  %v1083 = vld [vmem:[%s6 + $0x1c8] sm:$0xff]
  %v1084 = vld [vmem:[%s6 + $0x1d0] sm:$0xff]
  %v1085 = vld [vmem:[%s6 + $0x1d8] sm:$0xff]
  %v1086 = vld [vmem:[%s6 + $0x1e0] sm:$0xff]
  %v1087 = vld [vmem:[%s6 + $0x1e8] sm:$0xff]
  %v1088 = vld [vmem:[%s6 + $0x1f0] sm:$0xff]
  %v1089 = vld [vmem:[%s6 + $0x1f8] sm:$0xff]
  %v1090 = vld [vmem:[%s6 + $0x200] sm:$0xff]
  %v1091 = vld [vmem:[%s6 + $0x208] sm:$0xff]
  %v1092 = vld [vmem:[%s6 + $0x210] sm:$0xff]
  %v1093 = vld [vmem:[%s6 + $0x218] sm:$0xff]
  %v1094 = vld [vmem:[%s6 + $0x220] sm:$0xff]
  %v1095 = vld [vmem:[%s6 + $0x228] sm:$0xff]
  %v1096 = vld [vmem:[%s6 + $0x230] sm:$0xff]
  %v1097 = vld [vmem:[%s6 + $0x238] sm:$0xff]
  %v1098 = vld [vmem:[%s6 + $0x240] sm:$0xff]
  %v1099 = vld [vmem:[%s6 + $0x248] sm:$0xff]
  %v1100 = vld [vmem:[%s6 + $0x250] sm:$0xff]
  %v1101 = vld [vmem:[%s6 + $0x258] sm:$0xff]
  %v1102 = vld [vmem:[%s6 + $0x260] sm:$0xff]
  %v1103 = vld [vmem:[%s6 + $0x268] sm:$0xff]
  %v1104 = vld [vmem:[%s6 + $0x270] sm:$0xff]
  %v1105 = vld [vmem:[%s6 + $0x278] sm:$0xff]
  %v1106 = vld [vmem:[%s6 + $0x280] sm:$0xff]
  %v1107 = vld [vmem:[%s6 + $0x288] sm:$0xff]
  %v1108 = vld [vmem:[%s6 + $0x290] sm:$0xff]
  %v1109 = vld [vmem:[%s6 + $0x298] sm:$0xff]
  %v1110 = vld [vmem:[%s6 + $0x2a0] sm:$0xff]
  %v1111 = vld [vmem:[%s6 + $0x2a8] sm:$0xff]
  %v1112 = vld [vmem:[%s6 + $0x2b0] sm:$0xff]
  %v1113 = vld [vmem:[%s6 + $0x2b8] sm:$0xff]
  %v1114 = vld [vmem:[%s6 + $0x2c0] sm:$0xff]
  %v1115 = vld [vmem:[%s6 + $0x2c8] sm:$0xff]
  %v1116 = vld [vmem:[%s6 + $0x2d0] sm:$0xff]
  %v1117 = vld [vmem:[%s6 + $0x2d8] sm:$0xff]
  %v1118 = vld [vmem:[%s6 + $0x2e0] sm:$0xff]
  %v1119 = vld [vmem:[%s6 + $0x2e8] sm:$0xff]
  %v1120 = vld [vmem:[%s6 + $0x2f0] sm:$0xff]
  %v1121 = vld [vmem:[%s6 + $0x2f8] sm:$0xff]
  %v1122 = vld [vmem:[%s6 + $0x300] sm:$0xff]
  %v1123 = vld [vmem:[%s6 + $0x308] sm:$0xff]
  %v1124 = vld [vmem:[%s6 + $0x310] sm:$0xff]
  %v1125 = vld [vmem:[%s6 + $0x318] sm:$0xff]
  %v1126 = vld [vmem:[%s6 + $0x320] sm:$0xff]
  %v1127 = vld [vmem:[%s6 + $0x328] sm:$0xff]
  %v1128 = vld [vmem:[%s6 + $0x330] sm:$0xff]
  %v1129 = vld [vmem:[%s6 + $0x338] sm:$0xff]
  %v1130 = vld [vmem:[%s6 + $0x340] sm:$0xff]
  %v1131 = vld [vmem:[%s6 + $0x348] sm:$0xff]
  %v1132 = vld [vmem:[%s6 + $0x350] sm:$0xff]
  %v1133 = vld [vmem:[%s6 + $0x358] sm:$0xff]
  %v1134 = vld [vmem:[%s6 + $0x360] sm:$0xff]
  %v1135 = vld [vmem:[%s6 + $0x368] sm:$0xff]
  %v1136 = vld [vmem:[%s6 + $0x370] sm:$0xff]
  %v1137 = vld [vmem:[%s6 + $0x378] sm:$0xff]
  %v1138 = vld [vmem:[%s6 + $0x380] sm:$0xff]
  %v1139 = vld [vmem:[%s6 + $0x388] sm:$0xff]
  %v1140 = vld [vmem:[%s6 + $0x390] sm:$0xff]
  %v1141 = vld [vmem:[%s6 + $0x398] sm:$0xff]
  %v1142 = vld [vmem:[%s6 + $0x3a0] sm:$0xff]
  %v1143 = vld [vmem:[%s6 + $0x3a8] sm:$0xff]
  %v1144 = vld [vmem:[%s6 + $0x3b0] sm:$0xff]
  %v1145 = vld [vmem:[%s6 + $0x3b8] sm:$0xff]
  %v1146 = vld [vmem:[%s6 + $0x3c0] sm:$0xff]
  %v1147 = vld [vmem:[%s6 + $0x3c8] sm:$0xff]
  %v1148 = vld [vmem:[%s6 + $0x3d0] sm:$0xff]
  %v1149 = vld [vmem:[%s6 + $0x3d8] sm:$0xff]
  %v1150 = vld [vmem:[%s6 + $0x3e0] sm:$0xff]
  %v1151 = vld [vmem:[%s6 + $0x3e8] sm:$0xff]
  %v1152 = vld [vmem:[%s6 + $0x3f0] sm:$0xff]
  %v1153 = vld [vmem:[%s6 + $0x3f8] sm:$0xff]
  %v1154 = vld [vmem:[%s7] sm:$0xf]
  %v1156 = vlaneseq
  %v1157 = vshrl.u32 %v1156, 7
  %v1158 = vsub.s32 0, %v1157
  %v1159 = vrot.slane %v1154, %v1158
  %v1160 = vlaneseq
  %v1161 = vshrl.u32 %v1160, 7
  %v1162 = vsub.s32 1, %v1161
  %v1163 = vrot.slane %v1154, %v1162
  %v1164 = vlaneseq
  %v1165 = vshrl.u32 %v1164, 7
  %v1166 = vsub.s32 2, %v1165
  %v1167 = vrot.slane %v1154, %v1166
  %v1168 = vlaneseq
  %v1169 = vshrl.u32 %v1168, 7
  %v1170 = vsub.s32 3, %v1169
  %v1171 = vrot.slane %v1154, %v1170
  %v1178 = vrot.slane %v1024, 6
  %v1179 = vrot.slane %v1025, 6
  %1182 = vmatprep.subr.mxu0 %v1027
  %1183 = vmatpush1.msra.mxu0 %v1026
  %1184 = vmatprep.subr.mxu0 %v1031
  %1185 = vmatpush1.msra.mxu0 %v1030
  %1186 = vmatprep.subr.mxu0 %v1035
  %1187 = vmatpush1.msra.mxu0 %v1034
  %1188 = vmatprep.subr.mxu0 %v1039
  %1189 = vmatpush1.msra.mxu0 %v1038
  %1190 = vmatprep.subr.mxu0 %v1043
  %1191 = vmatpush1.msra.mxu0 %v1042
  %1192 = vmatprep.subr.mxu0 %v1047
  %1193 = vmatpush1.msra.mxu0 %v1046
  %1194 = vmatprep.subr.mxu0 %v1051
  %1195 = vmatpush1.msra.mxu0 %v1050
  %1196 = vmatprep.subr.mxu0 %v1055
  %1197 = vmatpush1.msra.mxu0 %v1054
  %1198 = vmatprep.subr.mxu0 %v1059
  %1199 = vmatpush1.msra.mxu0 %v1058
  %1200 = vmatprep.subr.mxu0 %v1063
  %1201 = vmatpush1.msra.mxu0 %v1062
  %1202 = vmatprep.subr.mxu0 %v1067
  %1203 = vmatpush1.msra.mxu0 %v1066
  %1204 = vmatprep.subr.mxu0 %v1071
  %1205 = vmatpush1.msra.mxu0 %v1070
  %1206 = vmatprep.subr.mxu0 %v1075
  %1207 = vmatpush1.msra.mxu0 %v1074
  %1208 = vmatprep.subr.mxu0 %v1079
  %1209 = vmatpush1.msra.mxu0 %v1078
  %1210 = vmatprep.subr.mxu0 %v1083
  %1211 = vmatpush1.msra.mxu0 %v1082
  %1212 = vmatprep.subr.mxu0 %v1087
  %1213 = vmatpush1.msra.mxu0 %v1086
  %1214 = vmatprep.subr.mxu0 %v1091
  %1215 = vmatpush1.msra.mxu0 %v1090
  %1216 = vmatprep.subr.mxu0 %v1095
  %1217 = vmatpush1.msra.mxu0 %v1094
  %1218 = vmatprep.subr.mxu0 %v1099
  %1219 = vmatpush1.msra.mxu0 %v1098
  %1220 = vmatprep.subr.mxu0 %v1103
  %1221 = vmatpush1.msra.mxu0 %v1102
  %1222 = vmatprep.subr.mxu0 %v1107
  %1223 = vmatpush1.msra.mxu0 %v1106
  %1224 = vmatprep.subr.mxu0 %v1111
  %1225 = vmatpush1.msra.mxu0 %v1110
  %1226 = vmatprep.subr.mxu0 %v1115
  %1227 = vmatpush1.msra.mxu0 %v1114
  %1228 = vmatprep.subr.mxu0 %v1119
  %1229 = vmatpush1.msra.mxu0 %v1118
  %1230 = vmatprep.subr.mxu0 %v1123
  %1231 = vmatpush1.msra.mxu0 %v1122
  %1232 = vmatprep.subr.mxu0 %v1127
  %1233 = vmatpush1.msra.mxu0 %v1126
  %1234 = vmatprep.subr.mxu0 %v1131
  %1235 = vmatpush1.msra.mxu0 %v1130
  %1236 = vmatprep.subr.mxu0 %v1135
  %1237 = vmatpush1.msra.mxu0 %v1134
  %1238 = vmatprep.subr.mxu0 %v1139
  %1239 = vmatpush1.msra.mxu0 %v1138
  %1240 = vmatprep.subr.mxu0 %v1143
  %1241 = vmatpush1.msra.mxu0 %v1142
  %1242 = vmatprep.subr.mxu0 %v1147
  %1243 = vmatpush1.msra.mxu0 %v1146
  %1244 = vmatprep.subr.mxu0 %v1151
  %1245 = vmatpush1.msra.mxu0 %v1150
  %1246 = vmatprep.mubr.f32.mxu0 %v1179
  %1247 = vmatmul.mubr.f32.gmra.mrb[0].mxu0 %v1178
  %v1248 = vpop.f32.mrb[0].mxu0
  %v1249 = vadd.f32 %v1159, %v1248
  %v1250 = vpop.f32.mrb[0].mxu0
  %v1251 = vadd.f32 %v1163, %v1250
  %1252 = vdwg.mxu0
  %1253 = vmatprep.subr.mxu0 %v1029
  %1254 = vmatpush1.msra.mxu0 %v1028
  %1255 = vmatprep.subr.mxu0 %v1033
  %1256 = vmatpush1.msra.mxu0 %v1032
  %1257 = vmatprep.subr.mxu0 %v1037
  %1258 = vmatpush1.msra.mxu0 %v1036
  %1259 = vmatprep.subr.mxu0 %v1041
  %1260 = vmatpush1.msra.mxu0 %v1040
  %1261 = vmatprep.subr.mxu0 %v1045
  %1262 = vmatpush1.msra.mxu0 %v1044
  %1263 = vmatprep.subr.mxu0 %v1049
  %1264 = vmatpush1.msra.mxu0 %v1048
  %1265 = vmatprep.subr.mxu0 %v1053
  %1266 = vmatpush1.msra.mxu0 %v1052
  %1267 = vmatprep.subr.mxu0 %v1057
  %1268 = vmatpush1.msra.mxu0 %v1056
  %1269 = vmatprep.subr.mxu0 %v1061
  %1270 = vmatpush1.msra.mxu0 %v1060
  %1271 = vmatprep.subr.mxu0 %v1065
  %1272 = vmatpush1.msra.mxu0 %v1064
  %1273 = vmatprep.subr.mxu0 %v1069
  %1274 = vmatpush1.msra.mxu0 %v1068
  %1275 = vmatprep.subr.mxu0 %v1073
  %1276 = vmatpush1.msra.mxu0 %v1072
  %1277 = vmatprep.subr.mxu0 %v1077
  %1278 = vmatpush1.msra.mxu0 %v1076
  %1279 = vmatprep.subr.mxu0 %v1081
  %1280 = vmatpush1.msra.mxu0 %v1080
  %1281 = vmatprep.subr.mxu0 %v1085
  %1282 = vmatpush1.msra.mxu0 %v1084
  %1283 = vmatprep.subr.mxu0 %v1089
  %1284 = vmatpush1.msra.mxu0 %v1088
  %1285 = vmatprep.subr.mxu0 %v1093
  %1286 = vmatpush1.msra.mxu0 %v1092
  %1287 = vmatprep.subr.mxu0 %v1097
  %1288 = vmatpush1.msra.mxu0 %v1096
  %1289 = vmatprep.subr.mxu0 %v1101
  %1290 = vmatpush1.msra.mxu0 %v1100
  %1291 = vmatprep.subr.mxu0 %v1105
  %1292 = vmatpush1.msra.mxu0 %v1104
  %1293 = vmatprep.subr.mxu0 %v1109
  %1294 = vmatpush1.msra.mxu0 %v1108
  %1295 = vmatprep.subr.mxu0 %v1113
  %1296 = vmatpush1.msra.mxu0 %v1112
  %1297 = vmatprep.subr.mxu0 %v1117
  %1298 = vmatpush1.msra.mxu0 %v1116
  %1299 = vmatprep.subr.mxu0 %v1121
  %1300 = vmatpush1.msra.mxu0 %v1120
  %1301 = vmatprep.subr.mxu0 %v1125
  %1302 = vmatpush1.msra.mxu0 %v1124
  %1303 = vmatprep.subr.mxu0 %v1129
  %1304 = vmatpush1.msra.mxu0 %v1128
  %1305 = vmatprep.subr.mxu0 %v1133
  %1306 = vmatpush1.msra.mxu0 %v1132
  %1307 = vmatprep.subr.mxu0 %v1137
  %1308 = vmatpush1.msra.mxu0 %v1136
  %1309 = vmatprep.subr.mxu0 %v1141
  %1310 = vmatpush1.msra.mxu0 %v1140
  %1311 = vmatprep.subr.mxu0 %v1145
  %1312 = vmatpush1.msra.mxu0 %v1144
  %1313 = vmatprep.subr.mxu0 %v1149
  %1314 = vmatpush1.msra.mxu0 %v1148
  %1315 = vmatprep.subr.mxu0 %v1153
  %1316 = vmatpush1.msra.mxu0 %v1152
  %1317 = vmatprep.mubr.f32.mxu0 %v1179
  %1318 = vmatmul.mubr.f32.gmra.mrb[0].mxu0 %v1178
  %v1319 = vpop.f32.mrb[0].mxu0
  %v1320 = vadd.f32 %v1167, %v1319
  %v1321 = vpop.f32.mrb[0].mxu0
  %v1322 = vadd.f32 %v1171, %v1321
  %1323 = vdwg.mxu0
  %v1324 = vmax.f32 %v1249, 0.0
  %v1325 = vmax.f32 %v1251, 0.0
  %v1326 = vmax.f32 %v1320, 0.0
  %v1327 = vmax.f32 %v1322, 0.0
  %v1328 = vld [vmem:[%s8] sm:$0xf]
  %v1330 = vlaneseq
  %v1331 = vshrl.u32 %v1330, 7
  %v1332 = vsub.s32 0, %v1331
  %v1333 = vrot.slane %v1328, %v1332
  %v1334 = vlaneseq
  %v1335 = vshrl.u32 %v1334, 7
  %v1336 = vsub.s32 1, %v1335
  %v1337 = vrot.slane %v1328, %v1336
  %v1338 = vlaneseq
  %v1339 = vshrl.u32 %v1338, 7
  %v1340 = vsub.s32 2, %v1339
  %v1341 = vrot.slane %v1328, %v1340
  %v1342 = vlaneseq
  %v1343 = vshrl.u32 %v1342, 7
  %v1344 = vsub.s32 3, %v1343
  %v1345 = vrot.slane %v1328, %v1344
  %v1350 = vmul.f32 %v1324, %v1333
  %v1351 = vmul.f32 %v1325, %v1337
  %v1352 = vmul.f32 %v1326, %v1341
  %v1353 = vmul.f32 %v1327, %v1345
  %vm1354 = vcmask 1041408
  %v1355 = vsel %vm1354, %v1350, 0.0
  %v1356 = vsel %vm1354, %v1351, 0.0
  %v1357 = vadd.f32 %v1355, %v1356
  %v1358 = vsel %vm1354, %v1352, 0.0
  %v1359 = vadd.f32 %v1357, %v1358
  %v1360 = vsel %vm1354, %v1353, 0.0
  %v1361 = vadd.f32 %v1359, %v1360
  %1362 = vadd.xlane.f32.xlu0 %v1361
  %v1363 = vpop.xlane.xlu0 %1362
  %v1364 = vld [vmem:[#allocation2] sm:$0x1]
  %v1366 = vlaneseq
  %v1367 = vshrl.u32 %v1366, 7
  %v1368 = vsub.s32 0, %v1367
  %v1369 = vrot.slane %v1364, %v1368
  %v1371 = vadd.f32 %v1363, %v1369
  %1373 = vset.pattern.permute.xlu0 0
  %1374 = vperm.xlu0 %1373, %v1371
  %v1375 = vpop.permute.xlu0 %1374
  %1377 = vst [vmem:[%s10] sm:$0x3] %v1375
  // Predicated region
  $region42: #{earthquake_rnn_forward.1} parent=0 // pred_check
    _
  $region43: #{earthquake_rnn_forward.1} parent=0 // pred_check_branch
    %1379 = sbr.rel (0) target = $region45
  $region44: #{earthquake_rnn_forward.1} parent=0 // pred_region
    _
  $region45: #{earthquake_rnn_forward.1} parent=0 // pred_fallthru
    _
  // Predicated region
  $region46: #{earthquake_rnn_forward.1} parent=0 // pred_check
    _
  $region47: #{earthquake_rnn_forward.1} parent=0 // pred_check_branch
    %1381 = sbr.rel (0) target = $region49
  $region48: #{earthquake_rnn_forward.1} parent=0 // pred_region
    _
  $region49: #{earthquake_rnn_forward.1} parent=0 // pred_fallthru
    _

</llo_original>
